<compile_context>
chip_gen: v7x
topology: tpu7x:2x2x1
jax: 0.10.0
libtpu: 0.0.40
codegen_flags: <defaults>
</compile_context>

<pallas_src>
import jax
import jax.numpy as jnp
from jax.experimental import pallas as pl
from jax.experimental.pallas import tpu as pltpu

EMBED_DIM = 256
H1 = 512
H2 = 256
OUT_DIM = 128
LN_EPS = 1e-5
MAX_TILE_B = 256  # multiple of 256 -> full MXU M passes on v6e/v7x


def _round_up(n, m):
    return ((n + m - 1) // m) * m


def encoder_kernel(x_ref, w1_ref, b1_ref, w2_ref, b2_ref, w3_ref, b3_ref,
                   gamma_ref, beta_ref, o_ref):
    # Seq-mean over dim=1 (matches torch.mean(x, dim=1)) as an unrolled f32
    # sum of S static slices: moves work off the XLU onto VALU/vector-load
    # slots which have slack.
    S = x_ref.shape[1]
    acc = x_ref[:, 0, :].astype(jnp.float32)
    for s in range(1, S):
        acc = acc + x_ref[:, s, :].astype(jnp.float32)
    x = acc * (1.0 / S)                                              # (TB, 256) f32

    # Linear 1 + ReLU : bf16 operands into the MXU, f32 accumulation.
    h1 = jnp.dot(x.astype(jnp.bfloat16), w1_ref[...],
                 preferred_element_type=jnp.float32) + b1_ref[...]
    h1 = jnp.maximum(h1, 0.0)                                        # (TB, 512)

    # Linear 2 + ReLU
    h2 = jnp.dot(h1.astype(jnp.bfloat16), w2_ref[...],
                 preferred_element_type=jnp.float32) + b2_ref[...]
    h2 = jnp.maximum(h2, 0.0)                                        # (TB, 256)

    # Linear 3
    h3 = jnp.dot(h2.astype(jnp.bfloat16), w3_ref[...],
                 preferred_element_type=jnp.float32) + b3_ref[...]   # (TB, 128)

    # LayerNorm over last dim, single-pass statistics (E[h^2] - mu^2), f32.
    mu = jnp.mean(h3, axis=-1, keepdims=True)
    msq = jnp.mean(h3 * h3, axis=-1, keepdims=True)
    var = jnp.maximum(msq - mu * mu, 0.0)
    y = (h3 - mu) * jax.lax.rsqrt(var + LN_EPS)
    o_ref[...] = (y * gamma_ref[...] + beta_ref[...]).astype(o_ref.dtype)


def embedding_encoder(x, params):
    """x: (B, S, D) or (B, D) float.  Returns (B, OUT_DIM) float32."""
    if x.ndim == 2:
        # torch path only averages when input is 3D; a singleton seq axis is
        # an identity mean.
        x = x[:, None, :]
    B, S, D = x.shape
    assert D == EMBED_DIM

    # Stream x in bf16 (it is the dominant HBM stream); seq-mean and LN
    # statistics are accumulated in f32 inside the kernel.
    x = x.astype(jnp.bfloat16)

    # Pad batch to a multiple of 16 (bf16 packs 2 rows/sublane); for large B
    # pad to a multiple of the batch tile so every grid step is full.
    b16 = max(16, _round_up(B, 16))
    if b16 <= MAX_TILE_B:
        tile_b, b_pad = b16, b16
    else:
        tile_b = MAX_TILE_B
        b_pad = _round_up(B, MAX_TILE_B)
    if b_pad != B:
        x = jnp.pad(x, ((0, b_pad - B), (0, 0), (0, 0)))

    w1, b1, w2, b2, w3, b3, gamma, beta = params

    # Constant index_maps: the ~0.6 MB of bf16 weights + biases/affine stay
    # VMEM-resident across batch tiles (Pallas skips re-DMA when the block
    # index is unchanged); only the x stream moves per grid step.
    def resident(shape):
        return pl.BlockSpec(shape, lambda i: (0,) * len(shape))

    out = pl.pallas_call(
        encoder_kernel,
        out_shape=jax.ShapeDtypeStruct((b_pad, OUT_DIM), jnp.float32),
        grid=(b_pad // tile_b,),
        in_specs=[
            pl.BlockSpec((tile_b, S, EMBED_DIM), lambda i: (i, 0, 0)),
            resident((EMBED_DIM, H1)),
            resident((1, H1)),
            resident((H1, H2)),
            resident((1, H2)),
            resident((H2, OUT_DIM)),
            resident((1, OUT_DIM)),
            resident((1, OUT_DIM)),
            resident((1, OUT_DIM)),
        ],
        out_specs=pl.BlockSpec((tile_b, OUT_DIM), lambda i: (i, 0)),
        compiler_params=pltpu.CompilerParams(
            dimension_semantics=("parallel",)),
    )(x, w1, b1, w2, b2, w3, b3, gamma, beta)

    return out[:B]


def init_params(key):
    """Deterministic synthetic parameters (shapes from the module __init__).

    Weights are stored (in_features, out_features) in bf16 so the kernel
    computes x @ W on the MXU with f32 accumulation; biases and LayerNorm
    affine parameters stay f32."""
    ks = jax.random.split(key, 6)
    scale = lambda fan_in: 1.0 / jnp.sqrt(jnp.float32(fan_in))
    w1 = (jax.random.normal(ks[0], (EMBED_DIM, H1), jnp.float32)
          * scale(EMBED_DIM)).astype(jnp.bfloat16)
    b1 = jax.random.normal(ks[1], (1, H1), jnp.float32) * 0.01
    w2 = (jax.random.normal(ks[2], (H1, H2), jnp.float32)
          * scale(H1)).astype(jnp.bfloat16)
    b2 = jax.random.normal(ks[3], (1, H2), jnp.float32) * 0.01
    w3 = (jax.random.normal(ks[4], (H2, OUT_DIM), jnp.float32)
          * scale(H2)).astype(jnp.bfloat16)
    b3 = jax.random.normal(ks[5], (1, OUT_DIM), jnp.float32) * 0.01
    gamma = jnp.ones((1, OUT_DIM), jnp.float32)   # LayerNorm weight init = 1
    beta = jnp.zeros((1, OUT_DIM), jnp.float32)   # LayerNorm bias init = 0
    return (w1, b1, w2, b2, w3, b3, gamma, beta)


def reference(x, params):
    """Pure-JAX reference of the PyTorch forward (same bf16 input/weight path)."""
    w1, b1, w2, b2, w3, b3, gamma, beta = params
    x = x.astype(jnp.bfloat16).astype(jnp.float32)
    if x.ndim == 3:
        x = jnp.mean(x, axis=1)
    h = jnp.dot(x.astype(jnp.bfloat16), w1,
                preferred_element_type=jnp.float32) + b1
    h = jnp.maximum(h, 0.0)
    h = jnp.dot(h.astype(jnp.bfloat16), w2,
                preferred_element_type=jnp.float32) + b2
    h = jnp.maximum(h, 0.0)
    h = jnp.dot(h.astype(jnp.bfloat16), w3,
                preferred_element_type=jnp.float32) + b3
    mu = jnp.mean(h, axis=-1, keepdims=True)
    var = jnp.mean((h - mu) ** 2, axis=-1, keepdims=True)
    return (h - mu) * jax.lax.rsqrt(var + LN_EPS) * gamma + beta


if __name__ == "__main__":
    key = jax.random.PRNGKey(0)
    k_x, k_p = jax.random.split(key)

    B, S = 2, 8
    x = jax.random.normal(k_x, (B, S, EMBED_DIM), jnp.float32)
    params = init_params(k_p)

    out = embedding_encoder(x, params)
    out = jax.block_until_ready(out)

    ref = reference(x, params)
    assert out.shape == (B, OUT_DIM)
    assert jnp.allclose(out, ref, atol=2e-2, rtol=2e-2), "mismatch vs reference"

    print("KERNEL_OK")
</pallas_src>

<mosaic_0001>
module attributes {stable_mosaic.version = 11 : i64} {
  func.func @encoder_kernel(%arg0: i32, %arg1: memref<16x8x256xbf16, #tpu.memory_space<vmem>>, %arg2: memref<256x512xbf16, #tpu.memory_space<vmem>>, %arg3: memref<1x512xf32, #tpu.memory_space<vmem>>, %arg4: memref<512x256xbf16, #tpu.memory_space<vmem>>, %arg5: memref<1x256xf32, #tpu.memory_space<vmem>>, %arg6: memref<256x128xbf16, #tpu.memory_space<vmem>>, %arg7: memref<1x128xf32, #tpu.memory_space<vmem>>, %arg8: memref<1x128xf32, #tpu.memory_space<vmem>>, %arg9: memref<1x128xf32, #tpu.memory_space<vmem>>, %arg10: memref<16x128xf32, #tpu.memory_space<vmem>>) attributes {dimension_semantics = [#tpu.dimension_semantics<parallel>], iteration_bounds = array<i64: 1>, scalar_prefetch = 0 : i64, scratch_operands = 0 : i64, tpu.core_type = #tpu.core_type<tc>, window_params = [{transform_indices = @transform_0, window_bounds = array<i64: 16, 8, 256>}, {pipeline_mode = #tpu.pipeline_mode<synchronous>, transform_indices = @transform_1, window_bounds = array<i64: 256, 512>}, {pipeline_mode = #tpu.pipeline_mode<synchronous>, transform_indices = @transform_2, window_bounds = array<i64: 1, 512>}, {pipeline_mode = #tpu.pipeline_mode<synchronous>, transform_indices = @transform_3, window_bounds = array<i64: 512, 256>}, {pipeline_mode = #tpu.pipeline_mode<synchronous>, transform_indices = @transform_4, window_bounds = array<i64: 1, 256>}, {pipeline_mode = #tpu.pipeline_mode<synchronous>, transform_indices = @transform_5, window_bounds = array<i64: 256, 128>}, {pipeline_mode = #tpu.pipeline_mode<synchronous>, transform_indices = @transform_6, window_bounds = array<i64: 1, 128>}, {pipeline_mode = #tpu.pipeline_mode<synchronous>, transform_indices = @transform_7, window_bounds = array<i64: 1, 128>}, {pipeline_mode = #tpu.pipeline_mode<synchronous>, transform_indices = @transform_8, window_bounds = array<i64: 1, 128>}, {transform_indices = @transform_9, window_bounds = array<i64: 16, 128>}]} {
    %c0 = arith.constant 0 : index
    %c0_0 = arith.constant 0 : index
    %c0_1 = arith.constant 0 : index
    %0 = vector.load %arg1[%c0, %c0_0, %c0_1] : memref<16x8x256xbf16, #tpu.memory_space<vmem>>, vector<16x1x256xbf16>
    %1 = vector.shape_cast %0 : vector<16x1x256xbf16> to vector<16x256xbf16>
    %2 = arith.extf %1 : vector<16x256xbf16> to vector<16x256xf32>
    %c0_2 = arith.constant 0 : index
    %c1 = arith.constant 1 : index
    %c0_3 = arith.constant 0 : index
    %3 = vector.load %arg1[%c0_2, %c1, %c0_3] : memref<16x8x256xbf16, #tpu.memory_space<vmem>>, vector<16x1x256xbf16>
    %4 = vector.shape_cast %3 : vector<16x1x256xbf16> to vector<16x256xbf16>
    %5 = arith.extf %4 : vector<16x256xbf16> to vector<16x256xf32>
    %6 = arith.addf %2, %5 : vector<16x256xf32>
    %c0_4 = arith.constant 0 : index
    %c2 = arith.constant 2 : index
    %c0_5 = arith.constant 0 : index
    %7 = vector.load %arg1[%c0_4, %c2, %c0_5] : memref<16x8x256xbf16, #tpu.memory_space<vmem>>, vector<16x1x256xbf16>
    %8 = vector.shape_cast %7 : vector<16x1x256xbf16> to vector<16x256xbf16>
    %9 = arith.extf %8 : vector<16x256xbf16> to vector<16x256xf32>
    %10 = arith.addf %6, %9 : vector<16x256xf32>
    %c0_6 = arith.constant 0 : index
    %c3 = arith.constant 3 : index
    %c0_7 = arith.constant 0 : index
    %11 = vector.load %arg1[%c0_6, %c3, %c0_7] : memref<16x8x256xbf16, #tpu.memory_space<vmem>>, vector<16x1x256xbf16>
    %12 = vector.shape_cast %11 : vector<16x1x256xbf16> to vector<16x256xbf16>
    %13 = arith.extf %12 : vector<16x256xbf16> to vector<16x256xf32>
    %14 = arith.addf %10, %13 : vector<16x256xf32>
    %c0_8 = arith.constant 0 : index
    %c4 = arith.constant 4 : index
    %c0_9 = arith.constant 0 : index
    %15 = vector.load %arg1[%c0_8, %c4, %c0_9] : memref<16x8x256xbf16, #tpu.memory_space<vmem>>, vector<16x1x256xbf16>
    %16 = vector.shape_cast %15 : vector<16x1x256xbf16> to vector<16x256xbf16>
    %17 = arith.extf %16 : vector<16x256xbf16> to vector<16x256xf32>
    %18 = arith.addf %14, %17 : vector<16x256xf32>
    %c0_10 = arith.constant 0 : index
    %c5 = arith.constant 5 : index
    %c0_11 = arith.constant 0 : index
    %19 = vector.load %arg1[%c0_10, %c5, %c0_11] : memref<16x8x256xbf16, #tpu.memory_space<vmem>>, vector<16x1x256xbf16>
    %20 = vector.shape_cast %19 : vector<16x1x256xbf16> to vector<16x256xbf16>
    %21 = arith.extf %20 : vector<16x256xbf16> to vector<16x256xf32>
    %22 = arith.addf %18, %21 : vector<16x256xf32>
    %c0_12 = arith.constant 0 : index
    %c6 = arith.constant 6 : index
    %c0_13 = arith.constant 0 : index
    %23 = vector.load %arg1[%c0_12, %c6, %c0_13] : memref<16x8x256xbf16, #tpu.memory_space<vmem>>, vector<16x1x256xbf16>
    %24 = vector.shape_cast %23 : vector<16x1x256xbf16> to vector<16x256xbf16>
    %25 = arith.extf %24 : vector<16x256xbf16> to vector<16x256xf32>
    %26 = arith.addf %22, %25 : vector<16x256xf32>
    %c0_14 = arith.constant 0 : index
    %c7 = arith.constant 7 : index
    %c0_15 = arith.constant 0 : index
    %27 = vector.load %arg1[%c0_14, %c7, %c0_15] : memref<16x8x256xbf16, #tpu.memory_space<vmem>>, vector<16x1x256xbf16>
    %28 = vector.shape_cast %27 : vector<16x1x256xbf16> to vector<16x256xbf16>
    %29 = arith.extf %28 : vector<16x256xbf16> to vector<16x256xf32>
    %30 = arith.addf %26, %29 : vector<16x256xf32>
    %cst = arith.constant 1.250000e-01 : f32
    %31 = vector.broadcast %cst : f32 to vector<16x256xf32>
    %32 = arith.mulf %30, %31 : vector<16x256xf32>
    %33 = arith.truncf %32 : vector<16x256xf32> to vector<16x256xbf16>
    %c0_16 = arith.constant 0 : index
    %c0_17 = arith.constant 0 : index
    %34 = vector.load %arg2[%c0_16, %c0_17] : memref<256x512xbf16, #tpu.memory_space<vmem>>, vector<256x512xbf16>
    %cst_18 = arith.constant dense<0.000000e+00> : vector<16x512xf32>
    %35 = tpu.matmul %33, %34, %cst_18 {dimension_numbers = #tpu.dot_dimension_numbers<[1], [0], [0], [1], [0, 0, 1, 1], [], []>} : vector<16x256xbf16>, vector<256x512xbf16>, vector<16x512xf32> -> vector<16x512xf32>
    %c0_19 = arith.constant 0 : index
    %c0_20 = arith.constant 0 : index
    %36 = vector.load %arg3[%c0_19, %c0_20] : memref<1x512xf32, #tpu.memory_space<vmem>>, vector<1x512xf32>
    %37 = vector.broadcast %36 : vector<1x512xf32> to vector<16x512xf32>
    %38 = arith.addf %35, %37 : vector<16x512xf32>
    %cst_21 = arith.constant 0.000000e+00 : f32
    %39 = vector.broadcast %cst_21 : f32 to vector<16x512xf32>
    %40 = arith.maximumf %38, %39 : vector<16x512xf32>
    %41 = arith.truncf %40 : vector<16x512xf32> to vector<16x512xbf16>
    %c0_22 = arith.constant 0 : index
    %c0_23 = arith.constant 0 : index
    %42 = vector.load %arg4[%c0_22, %c0_23] : memref<512x256xbf16, #tpu.memory_space<vmem>>, vector<512x256xbf16>
    %cst_24 = arith.constant dense<0.000000e+00> : vector<16x256xf32>
    %43 = tpu.matmul %41, %42, %cst_24 {dimension_numbers = #tpu.dot_dimension_numbers<[1], [0], [0], [1], [0, 0, 1, 1], [], []>} : vector<16x512xbf16>, vector<512x256xbf16>, vector<16x256xf32> -> vector<16x256xf32>
    %c0_25 = arith.constant 0 : index
    %c0_26 = arith.constant 0 : index
    %44 = vector.load %arg5[%c0_25, %c0_26] : memref<1x256xf32, #tpu.memory_space<vmem>>, vector<1x256xf32>
    %45 = vector.broadcast %44 : vector<1x256xf32> to vector<16x256xf32>
    %46 = arith.addf %43, %45 : vector<16x256xf32>
    %cst_27 = arith.constant 0.000000e+00 : f32
    %47 = vector.broadcast %cst_27 : f32 to vector<16x256xf32>
    %48 = arith.maximumf %46, %47 : vector<16x256xf32>
    %49 = arith.truncf %48 : vector<16x256xf32> to vector<16x256xbf16>
    %c0_28 = arith.constant 0 : index
    %c0_29 = arith.constant 0 : index
    %50 = vector.load %arg6[%c0_28, %c0_29] : memref<256x128xbf16, #tpu.memory_space<vmem>>, vector<256x128xbf16>
    %cst_30 = arith.constant dense<0.000000e+00> : vector<16x128xf32>
    %51 = tpu.matmul %49, %50, %cst_30 {dimension_numbers = #tpu.dot_dimension_numbers<[1], [0], [0], [1], [0, 0, 1, 1], [], []>} : vector<16x256xbf16>, vector<256x128xbf16>, vector<16x128xf32> -> vector<16x128xf32>
    %c0_31 = arith.constant 0 : index
    %c0_32 = arith.constant 0 : index
    %52 = vector.load %arg7[%c0_31, %c0_32] : memref<1x128xf32, #tpu.memory_space<vmem>>, vector<1x128xf32>
    %53 = vector.broadcast %52 : vector<1x128xf32> to vector<16x128xf32>
    %54 = arith.addf %51, %53 : vector<16x128xf32>
    %cst_33 = arith.constant dense<0.000000e+00> : vector<16xf32>
    %55 = vector.multi_reduction <add>, %54, %cst_33 [1] : vector<16x128xf32> to vector<16xf32>
    %56 = vector.shape_cast %55 : vector<16xf32> to vector<16x1xf32>
    %cst_34 = arith.constant 1.280000e+02 : f32
    %57 = vector.broadcast %cst_34 : f32 to vector<16x1xf32>
    %58 = arith.divf %56, %57 : vector<16x1xf32>
    %59 = arith.mulf %54, %54 : vector<16x128xf32>
    %cst_35 = arith.constant dense<0.000000e+00> : vector<16xf32>
    %60 = vector.multi_reduction <add>, %59, %cst_35 [1] : vector<16x128xf32> to vector<16xf32>
    %61 = vector.shape_cast %60 : vector<16xf32> to vector<16x1xf32>
    %cst_36 = arith.constant 1.280000e+02 : f32
    %62 = vector.broadcast %cst_36 : f32 to vector<16x1xf32>
    %63 = arith.divf %61, %62 : vector<16x1xf32>
    %64 = arith.mulf %58, %58 : vector<16x1xf32>
    %65 = arith.subf %63, %64 : vector<16x1xf32>
    %cst_37 = arith.constant 0.000000e+00 : f32
    %66 = vector.broadcast %cst_37 : f32 to vector<16x1xf32>
    %67 = arith.maximumf %65, %66 : vector<16x1xf32>
    %68 = vector.broadcast %58 : vector<16x1xf32> to vector<16x128xf32>
    %69 = arith.subf %54, %68 : vector<16x128xf32>
    %cst_38 = arith.constant 9.99999974E-6 : f32
    %70 = vector.broadcast %cst_38 : f32 to vector<16x1xf32>
    %71 = arith.addf %67, %70 : vector<16x1xf32>
    %72 = math.rsqrt %71 : vector<16x1xf32>
    %73 = vector.broadcast %72 : vector<16x1xf32> to vector<16x128xf32>
    %74 = arith.mulf %69, %73 : vector<16x128xf32>
    %c0_39 = arith.constant 0 : index
    %c0_40 = arith.constant 0 : index
    %75 = vector.load %arg8[%c0_39, %c0_40] : memref<1x128xf32, #tpu.memory_space<vmem>>, vector<1x128xf32>
    %76 = vector.broadcast %75 : vector<1x128xf32> to vector<16x128xf32>
    %77 = arith.mulf %74, %76 : vector<16x128xf32>
    %c0_41 = arith.constant 0 : index
    %c0_42 = arith.constant 0 : index
    %78 = vector.load %arg9[%c0_41, %c0_42] : memref<1x128xf32, #tpu.memory_space<vmem>>, vector<1x128xf32>
    %79 = vector.broadcast %78 : vector<1x128xf32> to vector<16x128xf32>
    %80 = arith.addf %77, %79 : vector<16x128xf32>
    %c0_43 = arith.constant 0 : index
    %c0_44 = arith.constant 0 : index
    %81 = vector.load %arg10[%c0_43, %c0_44] : memref<16x128xf32, #tpu.memory_space<vmem>>, vector<16x128xf32>
    tpu.vector_store %arg10[%c0_43, %c0_44], %80 {strides = array<i32>} : memref<16x128xf32, #tpu.memory_space<vmem>>, vector<16x128xf32>,
    return
  }
  func.func @transform_0(%arg0: i32) -> (i32, i32, i32) {
    %c0_i32 = arith.constant 0 : i32
    %c0_i32_0 = arith.constant 0 : i32
    %c0_i32_1 = arith.constant 0 : i32
    return %arg0, %c0_i32, %c0_i32_0 : i32, i32, i32
  }
  func.func @transform_1(%arg0: i32) -> (i32, i32) {
    %c0_i32 = arith.constant 0 : i32
    %c0_i32_0 = arith.constant 0 : i32
    %c0_i32_1 = arith.constant 0 : i32
    return %c0_i32, %c0_i32_0 : i32, i32
  }
  func.func @transform_2(%arg0: i32) -> (i32, i32) {
    %c0_i32 = arith.constant 0 : i32
    %c0_i32_0 = arith.constant 0 : i32
    %c0_i32_1 = arith.constant 0 : i32
    return %c0_i32, %c0_i32_0 : i32, i32
  }
  func.func @transform_3(%arg0: i32) -> (i32, i32) {
    %c0_i32 = arith.constant 0 : i32
    %c0_i32_0 = arith.constant 0 : i32
    %c0_i32_1 = arith.constant 0 : i32
    return %c0_i32, %c0_i32_0 : i32, i32
  }
  func.func @transform_4(%arg0: i32) -> (i32, i32) {
    %c0_i32 = arith.constant 0 : i32
    %c0_i32_0 = arith.constant 0 : i32
    %c0_i32_1 = arith.constant 0 : i32
    return %c0_i32, %c0_i32_0 : i32, i32
  }
  func.func @transform_5(%arg0: i32) -> (i32, i32) {
    %c0_i32 = arith.constant 0 : i32
    %c0_i32_0 = arith.constant 0 : i32
    %c0_i32_1 = arith.constant 0 : i32
    return %c0_i32, %c0_i32_0 : i32, i32
  }
  func.func @transform_6(%arg0: i32) -> (i32, i32) {
    %c0_i32 = arith.constant 0 : i32
    %c0_i32_0 = arith.constant 0 : i32
    %c0_i32_1 = arith.constant 0 : i32
    return %c0_i32, %c0_i32_0 : i32, i32
  }
  func.func @transform_7(%arg0: i32) -> (i32, i32) {
    %c0_i32 = arith.constant 0 : i32
    %c0_i32_0 = arith.constant 0 : i32
    %c0_i32_1 = arith.constant 0 : i32
    return %c0_i32, %c0_i32_0 : i32, i32
  }
  func.func @transform_8(%arg0: i32) -> (i32, i32) {
    %c0_i32 = arith.constant 0 : i32
    %c0_i32_0 = arith.constant 0 : i32
    %c0_i32_1 = arith.constant 0 : i32
    return %c0_i32, %c0_i32_0 : i32, i32
  }
  func.func @transform_9(%arg0: i32) -> (i32, i32) {
    %c0_i32 = arith.constant 0 : i32
    %c0_i32_0 = arith.constant 0 : i32
    return %arg0, %c0_i32 : i32, i32
  }
}

</mosaic_0001>

<llo_original>
// kernel: tpu_custom_call.1
$region0: #{tpu_custom_call.1}
  #allocation0 [shape = 'u32[]', space=smem, size = 0x4, offset = 0x4, fixed_abs, tag = 'smem constant byte address 0x4 - core index']
  #allocation1 [shape = 'u32[144,128]{1,0:T(1,128)}', space=vmem, size = 0x12000, scoped, tag = 'internal scratch']
  %s0 = inlined_call_operand.hbm [shape: bf16[16,8,256], index: 0, kind: input, shape index: {}]
  %s1 = inlined_call_operand.hbm [shape: bf16[256,512], index: 1, kind: input, shape index: {}]
  %s2 = inlined_call_operand.vmem [shape: f32[1,512], index: 2, kind: input, shape index: {}]
  %s3 = inlined_call_operand.hbm [shape: bf16[512,256], index: 3, kind: input, shape index: {}]
  %s4 = inlined_call_operand.vmem [shape: f32[1,256], index: 4, kind: input, shape index: {}]
  %s5 = inlined_call_operand.hbm [shape: bf16[256,128], index: 5, kind: input, shape index: {}]
  %s6 = inlined_call_operand.vmem [shape: f32[1,128], index: 6, kind: input, shape index: {}]
  %s7 = inlined_call_operand.vmem [shape: f32[1,128], index: 7, kind: input, shape index: {}]
  %s8 = inlined_call_operand.vmem [shape: f32[1,128], index: 8, kind: input, shape index: {}]
  %s9 = inlined_call_operand.hbm [shape: f32[16,128], index: 9, kind: output, shape index: {}]
  %s10 = sld [smem:[#allocation0]]
  $region62: #{tpu_custom_call.1} parent=0
    _
  %s12 = ssub.s32 1, %s10
  %s13 = scalar_select 0, %s12, %s10
  $region1: #{tpu_custom_call.1} parent=0
    #allocation2 [shape = 'u8[65536]{0}', space=vmem, size = 0x10000, scoped, tag = 'input window, operand 0, single buffered']
    #allocation3 [shape = 's32[1]{0}', space=sflag, size = 0x4, scoped, tag = 'scoped memory for tpu_custom_call.1']
    #allocation4 [shape = 's32[1]{0}', space=sflag, size = 0x4, scoped, tag = 'scoped memory for tpu_custom_call.1']
    #allocation5 [shape = 'u8[262144]{0}', space=vmem, size = 0x40000, scoped, tag = 'input window, operand 1, single buffered']
    #allocation6 [shape = 's32[1]{0}', space=sflag, size = 0x4, scoped, tag = 'scoped memory for tpu_custom_call.1']
    #allocation7 [shape = 'u8[262144]{0}', space=vmem, size = 0x40000, scoped, tag = 'input window, operand 3, single buffered']
    #allocation8 [shape = 'u8[65536]{0}', space=vmem, size = 0x10000, scoped, tag = 'input window, operand 5, single buffered']
    #allocation9 [shape = 's32[1]{0}', space=sflag, size = 0x4, scoped, tag = 'scoped memory for tpu_custom_call.1']
    #allocation10 [shape = 'u8[8192]{0}', space=vmem, size = 0x2000, scoped, tag = 'output window, operand 0, single buffered']
    %14 = vsyncpa [#allocation3], 0
    %15 = vsyncpa [#allocation6], 0
    %16 = vsyncpa [#allocation9], 0
    %17 = vsyncpa [#allocation4], 0
    // Predicated region
    $region2: #{tpu_custom_call.1} parent=1 // pred_check
      _
    $region3: #{tpu_custom_call.1} parent=1 // pred_check_branch
      %19 = sbr.rel (0) target = $region5
    $region4: #{tpu_custom_call.1} parent=1 // pred_region
      %s21 = ssub.s32 2048, 2048
      %22 = vsyncadd [#allocation3], %s21
      %s23 = sshll.u32 [#allocation2], 4
      %s24 = int_to_ptr.vmem [resolvable:$true] %s23
      %29 = dma.hbm_to_vmem [thread:$0]  %s0, 2048, %s24, [#allocation3], 128, 128, 8
    $region5: #{tpu_custom_call.1} parent=1 // pred_fallthru
      _
    // Predicated region
    $region6: #{tpu_custom_call.1} parent=1 // pred_check
      _
    $region7: #{tpu_custom_call.1} parent=1 // pred_check_branch
      %31 = sbr.rel (0) target = $region9
    $region8: #{tpu_custom_call.1} parent=1 // pred_region
      %s33 = ssub.s32 8192, 8192
      %34 = vsyncadd [#allocation6], %s33
      %s35 = sshll.u32 [#allocation5], 4
      %s36 = int_to_ptr.vmem [resolvable:$true] %s35
      %41 = dma.hbm_to_vmem [thread:$0]  %s1, 8192, %s36, [#allocation6], 256, 256, 16
    $region9: #{tpu_custom_call.1} parent=1 // pred_fallthru
      _
    // Predicated region
    $region10: #{tpu_custom_call.1} parent=1 // pred_check
      _
    $region11: #{tpu_custom_call.1} parent=1 // pred_check_branch
      %43 = sbr.rel (0) target = $region13
    $region12: #{tpu_custom_call.1} parent=1 // pred_region
      _
    $region13: #{tpu_custom_call.1} parent=1 // pred_fallthru
      _
    // Predicated region
    $region14: #{tpu_custom_call.1} parent=1 // pred_check
      _
    $region15: #{tpu_custom_call.1} parent=1 // pred_check_branch
      %45 = sbr.rel (0) target = $region17
    $region16: #{tpu_custom_call.1} parent=1 // pred_region
      %s47 = ssub.s32 8192, 8192
      %48 = vsyncadd [#allocation6], %s47
      %s49 = sshll.u32 [#allocation7], 4
      %s50 = int_to_ptr.vmem [resolvable:$true] %s49
      %55 = dma.hbm_to_vmem [thread:$0]  %s3, 8192, %s50, [#allocation6], 128, 128, 8
    $region17: #{tpu_custom_call.1} parent=1 // pred_fallthru
      _
    // Predicated region
    $region18: #{tpu_custom_call.1} parent=1 // pred_check
      _
    $region19: #{tpu_custom_call.1} parent=1 // pred_check_branch
      %57 = sbr.rel (0) target = $region21
    $region20: #{tpu_custom_call.1} parent=1 // pred_region
      _
    $region21: #{tpu_custom_call.1} parent=1 // pred_fallthru
      _
    // Predicated region
    $region22: #{tpu_custom_call.1} parent=1 // pred_check
      _
    $region23: #{tpu_custom_call.1} parent=1 // pred_check_branch
      %59 = sbr.rel (0) target = $region25
    $region24: #{tpu_custom_call.1} parent=1 // pred_region
      %s61 = ssub.s32 2048, 2048
      %62 = vsyncadd [#allocation9], %s61
      %s63 = sshll.u32 [#allocation8], 4
      %s64 = int_to_ptr.vmem [resolvable:$true] %s63
      %69 = dma.hbm_to_vmem [thread:$0]  %s5, 2048, %s64, [#allocation9], 64, 64, 4
    $region25: #{tpu_custom_call.1} parent=1 // pred_fallthru
      _
    // Predicated region
    $region26: #{tpu_custom_call.1} parent=1 // pred_check
      _
    $region27: #{tpu_custom_call.1} parent=1 // pred_check_branch
      %71 = sbr.rel (0) target = $region29
    $region28: #{tpu_custom_call.1} parent=1 // pred_region
      _
    $region29: #{tpu_custom_call.1} parent=1 // pred_fallthru
      _
    // Predicated region
    $region30: #{tpu_custom_call.1} parent=1 // pred_check
      _
    $region31: #{tpu_custom_call.1} parent=1 // pred_check_branch
      %73 = sbr.rel (0) target = $region33
    $region32: #{tpu_custom_call.1} parent=1 // pred_region
      _
    $region33: #{tpu_custom_call.1} parent=1 // pred_fallthru
      _
    // Predicated region
    $region34: #{tpu_custom_call.1} parent=1 // pred_check
      _
    $region35: #{tpu_custom_call.1} parent=1 // pred_check_branch
      %75 = sbr.rel (0) target = $region37
    $region36: #{tpu_custom_call.1} parent=1 // pred_region
      _
    $region37: #{tpu_custom_call.1} parent=1 // pred_fallthru
      _
    // Predicated region
    $region38: #{tpu_custom_call.1} parent=1 // pred_check
      _
    $region39: #{tpu_custom_call.1} parent=1 // pred_check_branch
      %77 = sbr.rel (0) target = $region41
    $region40: #{tpu_custom_call.1} parent=1 // pred_region
      %78 = dma.done [#allocation3], 2048
    $region41: #{tpu_custom_call.1} parent=1 // pred_fallthru
      _
    // Predicated region
    $region42: #{tpu_custom_call.1} parent=1 // pred_check
      _
    $region43: #{tpu_custom_call.1} parent=1 // pred_check_branch
      %80 = sbr.rel (0) target = $region45
    $region44: #{tpu_custom_call.1} parent=1 // pred_region
      %81 = dma.done [#allocation6], 8192
    $region45: #{tpu_custom_call.1} parent=1 // pred_fallthru
      _
    // Predicated region
    $region46: #{tpu_custom_call.1} parent=1 // pred_check
      _
    $region47: #{tpu_custom_call.1} parent=1 // pred_check_branch
      %83 = sbr.rel (0) target = $region49
    $region48: #{tpu_custom_call.1} parent=1 // pred_region
      %84 = dma.done [#allocation6], 8192
    $region49: #{tpu_custom_call.1} parent=1 // pred_fallthru
      _
    // Predicated region
    $region50: #{tpu_custom_call.1} parent=1 // pred_check
      _
    $region51: #{tpu_custom_call.1} parent=1 // pred_check_branch
      %86 = sbr.rel (0) target = $region53
    $region52: #{tpu_custom_call.1} parent=1 // pred_region
      %87 = dma.done [#allocation9], 2048
    $region53: #{tpu_custom_call.1} parent=1 // pred_fallthru
      _
    %v89 = vld [vmem:[#allocation2] sm:$0x11]
    %v90 = vld [vmem:[#allocation2 + $0x8] sm:$0x11]
    %v91 = vld [vmem:[#allocation2 + $0x10] sm:$0x11]
    %v92 = vld [vmem:[#allocation2 + $0x18] sm:$0x11]
    %v93 = vld [vmem:[#allocation2 + $0x20] sm:$0x11]
    %v94 = vld [vmem:[#allocation2 + $0x28] sm:$0x11]
    %v95 = vld [vmem:[#allocation2 + $0x30] sm:$0x11]
    %v96 = vld [vmem:[#allocation2 + $0x38] sm:$0x11]
    %v97 = vld [vmem:[#allocation2 + $0x40] sm:$0x11]
    %v98 = vld [vmem:[#allocation2 + $0x48] sm:$0x11]
    %v99 = vld [vmem:[#allocation2 + $0x50] sm:$0x11]
    %v100 = vld [vmem:[#allocation2 + $0x58] sm:$0x11]
    %v101 = vld [vmem:[#allocation2 + $0x60] sm:$0x11]
    %v102 = vld [vmem:[#allocation2 + $0x68] sm:$0x11]
    %v103 = vld [vmem:[#allocation2 + $0x70] sm:$0x11]
    %v104 = vld [vmem:[#allocation2 + $0x78] sm:$0x11]
    %v105 = vunpack.c.l.bf16 %v89
    %v106 = vunpack.c.h.bf16 %v89
    %v107 = vunpack.c.l.bf16 %v90
    %v108 = vunpack.c.h.bf16 %v90
    %v109 = vunpack.c.l.bf16 %v91
    %v110 = vunpack.c.h.bf16 %v91
    %v111 = vunpack.c.l.bf16 %v92
    %v112 = vunpack.c.h.bf16 %v92
    %v113 = vunpack.c.l.bf16 %v93
    %v114 = vunpack.c.h.bf16 %v93
    %v115 = vunpack.c.l.bf16 %v94
    %v116 = vunpack.c.h.bf16 %v94
    %v117 = vunpack.c.l.bf16 %v95
    %v118 = vunpack.c.h.bf16 %v95
    %v119 = vunpack.c.l.bf16 %v96
    %v120 = vunpack.c.h.bf16 %v96
    %v121 = vunpack.c.l.bf16 %v97
    %v122 = vunpack.c.h.bf16 %v97
    %v123 = vunpack.c.l.bf16 %v98
    %v124 = vunpack.c.h.bf16 %v98
    %v125 = vunpack.c.l.bf16 %v99
    %v126 = vunpack.c.h.bf16 %v99
    %v127 = vunpack.c.l.bf16 %v100
    %v128 = vunpack.c.h.bf16 %v100
    %v129 = vunpack.c.l.bf16 %v101
    %v130 = vunpack.c.h.bf16 %v101
    %v131 = vunpack.c.l.bf16 %v102
    %v132 = vunpack.c.h.bf16 %v102
    %v133 = vunpack.c.l.bf16 %v103
    %v134 = vunpack.c.h.bf16 %v103
    %v135 = vunpack.c.l.bf16 %v104
    %v136 = vunpack.c.h.bf16 %v104
    %v169 = vrot.slane %v105, 1
    %v170 = vrot.slane %v106, 1
    %v171 = vrot.slane %v107, 1
    %v172 = vrot.slane %v108, 1
    %v173 = vrot.slane %v109, 1
    %v174 = vrot.slane %v110, 1
    %v175 = vrot.slane %v111, 1
    %v176 = vrot.slane %v112, 1
    %v177 = vrot.slane %v113, 1
    %v178 = vrot.slane %v114, 1
    %v179 = vrot.slane %v115, 1
    %v180 = vrot.slane %v116, 1
    %v181 = vrot.slane %v117, 1
    %v182 = vrot.slane %v118, 1
    %v183 = vrot.slane %v119, 1
    %v184 = vrot.slane %v120, 1
    %v185 = vrot.slane %v121, 1
    %v186 = vrot.slane %v122, 1
    %v187 = vrot.slane %v123, 1
    %v188 = vrot.slane %v124, 1
    %v189 = vrot.slane %v125, 1
    %v190 = vrot.slane %v126, 1
    %v191 = vrot.slane %v127, 1
    %v192 = vrot.slane %v128, 1
    %v193 = vrot.slane %v129, 1
    %v194 = vrot.slane %v130, 1
    %v195 = vrot.slane %v131, 1
    %v196 = vrot.slane %v132, 1
    %v197 = vrot.slane %v133, 1
    %v198 = vrot.slane %v134, 1
    %v199 = vrot.slane %v135, 1
    %v200 = vrot.slane %v136, 1
    %v233 = vadd.f32 %v105, %v169
    %v234 = vadd.f32 %v106, %v170
    %v235 = vadd.f32 %v107, %v171
    %v236 = vadd.f32 %v108, %v172
    %v237 = vadd.f32 %v109, %v173
    %v238 = vadd.f32 %v110, %v174
    %v239 = vadd.f32 %v111, %v175
    %v240 = vadd.f32 %v112, %v176
    %v241 = vadd.f32 %v113, %v177
    %v242 = vadd.f32 %v114, %v178
    %v243 = vadd.f32 %v115, %v179
    %v244 = vadd.f32 %v116, %v180
    %v245 = vadd.f32 %v117, %v181
    %v246 = vadd.f32 %v118, %v182
    %v247 = vadd.f32 %v119, %v183
    %v248 = vadd.f32 %v120, %v184
    %v249 = vadd.f32 %v121, %v185
    %v250 = vadd.f32 %v122, %v186
    %v251 = vadd.f32 %v123, %v187
    %v252 = vadd.f32 %v124, %v188
    %v253 = vadd.f32 %v125, %v189
    %v254 = vadd.f32 %v126, %v190
    %v255 = vadd.f32 %v127, %v191
    %v256 = vadd.f32 %v128, %v192
    %v257 = vadd.f32 %v129, %v193
    %v258 = vadd.f32 %v130, %v194
    %v259 = vadd.f32 %v131, %v195
    %v260 = vadd.f32 %v132, %v196
    %v261 = vadd.f32 %v133, %v197
    %v262 = vadd.f32 %v134, %v198
    %v263 = vadd.f32 %v135, %v199
    %v264 = vadd.f32 %v136, %v200
    %v265 = vld [vmem:[#allocation2] sm:$0x22]
    %v266 = vld [vmem:[#allocation2 + $0x8] sm:$0x22]
    %v267 = vld [vmem:[#allocation2 + $0x10] sm:$0x22]
    %v268 = vld [vmem:[#allocation2 + $0x18] sm:$0x22]
    %v269 = vld [vmem:[#allocation2 + $0x20] sm:$0x22]
    %v270 = vld [vmem:[#allocation2 + $0x28] sm:$0x22]
    %v271 = vld [vmem:[#allocation2 + $0x30] sm:$0x22]
    %v272 = vld [vmem:[#allocation2 + $0x38] sm:$0x22]
    %v273 = vld [vmem:[#allocation2 + $0x40] sm:$0x22]
    %v274 = vld [vmem:[#allocation2 + $0x48] sm:$0x22]
    %v275 = vld [vmem:[#allocation2 + $0x50] sm:$0x22]
    %v276 = vld [vmem:[#allocation2 + $0x58] sm:$0x22]
    %v277 = vld [vmem:[#allocation2 + $0x60] sm:$0x22]
    %v278 = vld [vmem:[#allocation2 + $0x68] sm:$0x22]
    %v279 = vld [vmem:[#allocation2 + $0x70] sm:$0x22]
    %v280 = vld [vmem:[#allocation2 + $0x78] sm:$0x22]
    %v281 = vunpack.c.l.bf16 %v265
    %v282 = vunpack.c.h.bf16 %v265
    %v283 = vunpack.c.l.bf16 %v266
    %v284 = vunpack.c.h.bf16 %v266
    %v285 = vunpack.c.l.bf16 %v267
    %v286 = vunpack.c.h.bf16 %v267
    %v287 = vunpack.c.l.bf16 %v268
    %v288 = vunpack.c.h.bf16 %v268
    %v289 = vunpack.c.l.bf16 %v269
    %v290 = vunpack.c.h.bf16 %v269
    %v291 = vunpack.c.l.bf16 %v270
    %v292 = vunpack.c.h.bf16 %v270
    %v293 = vunpack.c.l.bf16 %v271
    %v294 = vunpack.c.h.bf16 %v271
    %v295 = vunpack.c.l.bf16 %v272
    %v296 = vunpack.c.h.bf16 %v272
    %v297 = vunpack.c.l.bf16 %v273
    %v298 = vunpack.c.h.bf16 %v273
    %v299 = vunpack.c.l.bf16 %v274
    %v300 = vunpack.c.h.bf16 %v274
    %v301 = vunpack.c.l.bf16 %v275
    %v302 = vunpack.c.h.bf16 %v275
    %v303 = vunpack.c.l.bf16 %v276
    %v304 = vunpack.c.h.bf16 %v276
    %v305 = vunpack.c.l.bf16 %v277
    %v306 = vunpack.c.h.bf16 %v277
    %v307 = vunpack.c.l.bf16 %v278
    %v308 = vunpack.c.h.bf16 %v278
    %v309 = vunpack.c.l.bf16 %v279
    %v310 = vunpack.c.h.bf16 %v279
    %v311 = vunpack.c.l.bf16 %v280
    %v312 = vunpack.c.h.bf16 %v280
    %v345 = vrot.slane %v281, 2
    %v346 = vrot.slane %v282, 2
    %v347 = vrot.slane %v283, 2
    %v348 = vrot.slane %v284, 2
    %v349 = vrot.slane %v285, 2
    %v350 = vrot.slane %v286, 2
    %v351 = vrot.slane %v287, 2
    %v352 = vrot.slane %v288, 2
    %v353 = vrot.slane %v289, 2
    %v354 = vrot.slane %v290, 2
    %v355 = vrot.slane %v291, 2
    %v356 = vrot.slane %v292, 2
    %v357 = vrot.slane %v293, 2
    %v358 = vrot.slane %v294, 2
    %v359 = vrot.slane %v295, 2
    %v360 = vrot.slane %v296, 2
    %v361 = vrot.slane %v297, 2
    %v362 = vrot.slane %v298, 2
    %v363 = vrot.slane %v299, 2
    %v364 = vrot.slane %v300, 2
    %v365 = vrot.slane %v301, 2
    %v366 = vrot.slane %v302, 2
    %v367 = vrot.slane %v303, 2
    %v368 = vrot.slane %v304, 2
    %v369 = vrot.slane %v305, 2
    %v370 = vrot.slane %v306, 2
    %v371 = vrot.slane %v307, 2
    %v372 = vrot.slane %v308, 2
    %v373 = vrot.slane %v309, 2
    %v374 = vrot.slane %v310, 2
    %v375 = vrot.slane %v311, 2
    %v376 = vrot.slane %v312, 2
    %v409 = vadd.f32 %v233, %v345
    %v410 = vadd.f32 %v234, %v346
    %v411 = vadd.f32 %v235, %v347
    %v412 = vadd.f32 %v236, %v348
    %v413 = vadd.f32 %v237, %v349
    %v414 = vadd.f32 %v238, %v350
    %v415 = vadd.f32 %v239, %v351
    %v416 = vadd.f32 %v240, %v352
    %v417 = vadd.f32 %v241, %v353
    %v418 = vadd.f32 %v242, %v354
    %v419 = vadd.f32 %v243, %v355
    %v420 = vadd.f32 %v244, %v356
    %v421 = vadd.f32 %v245, %v357
    %v422 = vadd.f32 %v246, %v358
    %v423 = vadd.f32 %v247, %v359
    %v424 = vadd.f32 %v248, %v360
    %v425 = vadd.f32 %v249, %v361
    %v426 = vadd.f32 %v250, %v362
    %v427 = vadd.f32 %v251, %v363
    %v428 = vadd.f32 %v252, %v364
    %v429 = vadd.f32 %v253, %v365
    %v430 = vadd.f32 %v254, %v366
    %v431 = vadd.f32 %v255, %v367
    %v432 = vadd.f32 %v256, %v368
    %v433 = vadd.f32 %v257, %v369
    %v434 = vadd.f32 %v258, %v370
    %v435 = vadd.f32 %v259, %v371
    %v436 = vadd.f32 %v260, %v372
    %v437 = vadd.f32 %v261, %v373
    %v438 = vadd.f32 %v262, %v374
    %v439 = vadd.f32 %v263, %v375
    %v440 = vadd.f32 %v264, %v376
    %v441 = vrot.slane %v281, 3
    %v442 = vrot.slane %v282, 3
    %v443 = vrot.slane %v283, 3
    %v444 = vrot.slane %v284, 3
    %v445 = vrot.slane %v285, 3
    %v446 = vrot.slane %v286, 3
    %v447 = vrot.slane %v287, 3
    %v448 = vrot.slane %v288, 3
    %v449 = vrot.slane %v289, 3
    %v450 = vrot.slane %v290, 3
    %v451 = vrot.slane %v291, 3
    %v452 = vrot.slane %v292, 3
    %v453 = vrot.slane %v293, 3
    %v454 = vrot.slane %v294, 3
    %v455 = vrot.slane %v295, 3
    %v456 = vrot.slane %v296, 3
    %v457 = vrot.slane %v297, 3
    %v458 = vrot.slane %v298, 3
    %v459 = vrot.slane %v299, 3
    %v460 = vrot.slane %v300, 3
    %v461 = vrot.slane %v301, 3
    %v462 = vrot.slane %v302, 3
    %v463 = vrot.slane %v303, 3
    %v464 = vrot.slane %v304, 3
    %v465 = vrot.slane %v305, 3
    %v466 = vrot.slane %v306, 3
    %v467 = vrot.slane %v307, 3
    %v468 = vrot.slane %v308, 3
    %v469 = vrot.slane %v309, 3
    %v470 = vrot.slane %v310, 3
    %v471 = vrot.slane %v311, 3
    %v472 = vrot.slane %v312, 3
    %v505 = vadd.f32 %v409, %v441
    %v506 = vadd.f32 %v410, %v442
    %v507 = vadd.f32 %v411, %v443
    %v508 = vadd.f32 %v412, %v444
    %v509 = vadd.f32 %v413, %v445
    %v510 = vadd.f32 %v414, %v446
    %v511 = vadd.f32 %v415, %v447
    %v512 = vadd.f32 %v416, %v448
    %v513 = vadd.f32 %v417, %v449
    %v514 = vadd.f32 %v418, %v450
    %v515 = vadd.f32 %v419, %v451
    %v516 = vadd.f32 %v420, %v452
    %v517 = vadd.f32 %v421, %v453
    %v518 = vadd.f32 %v422, %v454
    %v519 = vadd.f32 %v423, %v455
    %v520 = vadd.f32 %v424, %v456
    %v521 = vadd.f32 %v425, %v457
    %v522 = vadd.f32 %v426, %v458
    %v523 = vadd.f32 %v427, %v459
    %v524 = vadd.f32 %v428, %v460
    %v525 = vadd.f32 %v429, %v461
    %v526 = vadd.f32 %v430, %v462
    %v527 = vadd.f32 %v431, %v463
    %v528 = vadd.f32 %v432, %v464
    %v529 = vadd.f32 %v433, %v465
    %v530 = vadd.f32 %v434, %v466
    %v531 = vadd.f32 %v435, %v467
    %v532 = vadd.f32 %v436, %v468
    %v533 = vadd.f32 %v437, %v469
    %v534 = vadd.f32 %v438, %v470
    %v535 = vadd.f32 %v439, %v471
    %v536 = vadd.f32 %v440, %v472
    %v537 = vld [vmem:[#allocation2] sm:$0x44]
    %v538 = vld [vmem:[#allocation2 + $0x8] sm:$0x44]
    %v539 = vld [vmem:[#allocation2 + $0x10] sm:$0x44]
    %v540 = vld [vmem:[#allocation2 + $0x18] sm:$0x44]
    %v541 = vld [vmem:[#allocation2 + $0x20] sm:$0x44]
    %v542 = vld [vmem:[#allocation2 + $0x28] sm:$0x44]
    %v543 = vld [vmem:[#allocation2 + $0x30] sm:$0x44]
    %v544 = vld [vmem:[#allocation2 + $0x38] sm:$0x44]
    %v545 = vld [vmem:[#allocation2 + $0x40] sm:$0x44]
    %v546 = vld [vmem:[#allocation2 + $0x48] sm:$0x44]
    %v547 = vld [vmem:[#allocation2 + $0x50] sm:$0x44]
    %v548 = vld [vmem:[#allocation2 + $0x58] sm:$0x44]
    %v549 = vld [vmem:[#allocation2 + $0x60] sm:$0x44]
    %v550 = vld [vmem:[#allocation2 + $0x68] sm:$0x44]
    %v551 = vld [vmem:[#allocation2 + $0x70] sm:$0x44]
    %v552 = vld [vmem:[#allocation2 + $0x78] sm:$0x44]
    %v553 = vunpack.c.l.bf16 %v537
    %v554 = vunpack.c.h.bf16 %v537
    %v555 = vunpack.c.l.bf16 %v538
    %v556 = vunpack.c.h.bf16 %v538
    %v557 = vunpack.c.l.bf16 %v539
    %v558 = vunpack.c.h.bf16 %v539
    %v559 = vunpack.c.l.bf16 %v540
    %v560 = vunpack.c.h.bf16 %v540
    %v561 = vunpack.c.l.bf16 %v541
    %v562 = vunpack.c.h.bf16 %v541
    %v563 = vunpack.c.l.bf16 %v542
    %v564 = vunpack.c.h.bf16 %v542
    %v565 = vunpack.c.l.bf16 %v543
    %v566 = vunpack.c.h.bf16 %v543
    %v567 = vunpack.c.l.bf16 %v544
    %v568 = vunpack.c.h.bf16 %v544
    %v569 = vunpack.c.l.bf16 %v545
    %v570 = vunpack.c.h.bf16 %v545
    %v571 = vunpack.c.l.bf16 %v546
    %v572 = vunpack.c.h.bf16 %v546
    %v573 = vunpack.c.l.bf16 %v547
    %v574 = vunpack.c.h.bf16 %v547
    %v575 = vunpack.c.l.bf16 %v548
    %v576 = vunpack.c.h.bf16 %v548
    %v577 = vunpack.c.l.bf16 %v549
    %v578 = vunpack.c.h.bf16 %v549
    %v579 = vunpack.c.l.bf16 %v550
    %v580 = vunpack.c.h.bf16 %v550
    %v581 = vunpack.c.l.bf16 %v551
    %v582 = vunpack.c.h.bf16 %v551
    %v583 = vunpack.c.l.bf16 %v552
    %v584 = vunpack.c.h.bf16 %v552
    %v617 = vrot.slane %v553, 4
    %v618 = vrot.slane %v554, 4
    %v619 = vrot.slane %v555, 4
    %v620 = vrot.slane %v556, 4
    %v621 = vrot.slane %v557, 4
    %v622 = vrot.slane %v558, 4
    %v623 = vrot.slane %v559, 4
    %v624 = vrot.slane %v560, 4
    %v625 = vrot.slane %v561, 4
    %v626 = vrot.slane %v562, 4
    %v627 = vrot.slane %v563, 4
    %v628 = vrot.slane %v564, 4
    %v629 = vrot.slane %v565, 4
    %v630 = vrot.slane %v566, 4
    %v631 = vrot.slane %v567, 4
    %v632 = vrot.slane %v568, 4
    %v633 = vrot.slane %v569, 4
    %v634 = vrot.slane %v570, 4
    %v635 = vrot.slane %v571, 4
    %v636 = vrot.slane %v572, 4
    %v637 = vrot.slane %v573, 4
    %v638 = vrot.slane %v574, 4
    %v639 = vrot.slane %v575, 4
    %v640 = vrot.slane %v576, 4
    %v641 = vrot.slane %v577, 4
    %v642 = vrot.slane %v578, 4
    %v643 = vrot.slane %v579, 4
    %v644 = vrot.slane %v580, 4
    %v645 = vrot.slane %v581, 4
    %v646 = vrot.slane %v582, 4
    %v647 = vrot.slane %v583, 4
    %v648 = vrot.slane %v584, 4
    %v681 = vadd.f32 %v505, %v617
    %v682 = vadd.f32 %v506, %v618
    %v683 = vadd.f32 %v507, %v619
    %v684 = vadd.f32 %v508, %v620
    %v685 = vadd.f32 %v509, %v621
    %v686 = vadd.f32 %v510, %v622
    %v687 = vadd.f32 %v511, %v623
    %v688 = vadd.f32 %v512, %v624
    %v689 = vadd.f32 %v513, %v625
    %v690 = vadd.f32 %v514, %v626
    %v691 = vadd.f32 %v515, %v627
    %v692 = vadd.f32 %v516, %v628
    %v693 = vadd.f32 %v517, %v629
    %v694 = vadd.f32 %v518, %v630
    %v695 = vadd.f32 %v519, %v631
    %v696 = vadd.f32 %v520, %v632
    %v697 = vadd.f32 %v521, %v633
    %v698 = vadd.f32 %v522, %v634
    %v699 = vadd.f32 %v523, %v635
    %v700 = vadd.f32 %v524, %v636
    %v701 = vadd.f32 %v525, %v637
    %v702 = vadd.f32 %v526, %v638
    %v703 = vadd.f32 %v527, %v639
    %v704 = vadd.f32 %v528, %v640
    %v705 = vadd.f32 %v529, %v641
    %v706 = vadd.f32 %v530, %v642
    %v707 = vadd.f32 %v531, %v643
    %v708 = vadd.f32 %v532, %v644
    %v709 = vadd.f32 %v533, %v645
    %v710 = vadd.f32 %v534, %v646
    %v711 = vadd.f32 %v535, %v647
    %v712 = vadd.f32 %v536, %v648
    %v713 = vrot.slane %v553, 5
    %v714 = vrot.slane %v554, 5
    %v715 = vrot.slane %v555, 5
    %v716 = vrot.slane %v556, 5
    %v717 = vrot.slane %v557, 5
    %v718 = vrot.slane %v558, 5
    %v719 = vrot.slane %v559, 5
    %v720 = vrot.slane %v560, 5
    %v721 = vrot.slane %v561, 5
    %v722 = vrot.slane %v562, 5
    %v723 = vrot.slane %v563, 5
    %v724 = vrot.slane %v564, 5
    %v725 = vrot.slane %v565, 5
    %v726 = vrot.slane %v566, 5
    %v727 = vrot.slane %v567, 5
    %v728 = vrot.slane %v568, 5
    %v729 = vrot.slane %v569, 5
    %v730 = vrot.slane %v570, 5
    %v731 = vrot.slane %v571, 5
    %v732 = vrot.slane %v572, 5
    %v733 = vrot.slane %v573, 5
    %v734 = vrot.slane %v574, 5
    %v735 = vrot.slane %v575, 5
    %v736 = vrot.slane %v576, 5
    %v737 = vrot.slane %v577, 5
    %v738 = vrot.slane %v578, 5
    %v739 = vrot.slane %v579, 5
    %v740 = vrot.slane %v580, 5
    %v741 = vrot.slane %v581, 5
    %v742 = vrot.slane %v582, 5
    %v743 = vrot.slane %v583, 5
    %v744 = vrot.slane %v584, 5
    %v777 = vadd.f32 %v681, %v713
    %v778 = vadd.f32 %v682, %v714
    %v779 = vadd.f32 %v683, %v715
    %v780 = vadd.f32 %v684, %v716
    %v781 = vadd.f32 %v685, %v717
    %v782 = vadd.f32 %v686, %v718
    %v783 = vadd.f32 %v687, %v719
    %v784 = vadd.f32 %v688, %v720
    %v785 = vadd.f32 %v689, %v721
    %v786 = vadd.f32 %v690, %v722
    %v787 = vadd.f32 %v691, %v723
    %v788 = vadd.f32 %v692, %v724
    %v789 = vadd.f32 %v693, %v725
    %v790 = vadd.f32 %v694, %v726
    %v791 = vadd.f32 %v695, %v727
    %v792 = vadd.f32 %v696, %v728
    %v793 = vadd.f32 %v697, %v729
    %v794 = vadd.f32 %v698, %v730
    %v795 = vadd.f32 %v699, %v731
    %v796 = vadd.f32 %v700, %v732
    %v797 = vadd.f32 %v701, %v733
    %v798 = vadd.f32 %v702, %v734
    %v799 = vadd.f32 %v703, %v735
    %v800 = vadd.f32 %v704, %v736
    %v801 = vadd.f32 %v705, %v737
    %v802 = vadd.f32 %v706, %v738
    %v803 = vadd.f32 %v707, %v739
    %v804 = vadd.f32 %v708, %v740
    %v805 = vadd.f32 %v709, %v741
    %v806 = vadd.f32 %v710, %v742
    %v807 = vadd.f32 %v711, %v743
    %v808 = vadd.f32 %v712, %v744
    %v809 = vld [vmem:[#allocation2] sm:$0x88]
    %v810 = vld [vmem:[#allocation2 + $0x8] sm:$0x88]
    %v811 = vld [vmem:[#allocation2 + $0x10] sm:$0x88]
    %v812 = vld [vmem:[#allocation2 + $0x18] sm:$0x88]
    %v813 = vld [vmem:[#allocation2 + $0x20] sm:$0x88]
    %v814 = vld [vmem:[#allocation2 + $0x28] sm:$0x88]
    %v815 = vld [vmem:[#allocation2 + $0x30] sm:$0x88]
    %v816 = vld [vmem:[#allocation2 + $0x38] sm:$0x88]
    %v817 = vld [vmem:[#allocation2 + $0x40] sm:$0x88]
    %v818 = vld [vmem:[#allocation2 + $0x48] sm:$0x88]
    %v819 = vld [vmem:[#allocation2 + $0x50] sm:$0x88]
    %v820 = vld [vmem:[#allocation2 + $0x58] sm:$0x88]
    %v821 = vld [vmem:[#allocation2 + $0x60] sm:$0x88]
    %v822 = vld [vmem:[#allocation2 + $0x68] sm:$0x88]
    %v823 = vld [vmem:[#allocation2 + $0x70] sm:$0x88]
    %v824 = vld [vmem:[#allocation2 + $0x78] sm:$0x88]
    %v825 = vunpack.c.l.bf16 %v809
    %v826 = vunpack.c.h.bf16 %v809
    %v827 = vunpack.c.l.bf16 %v810
    %v828 = vunpack.c.h.bf16 %v810
    %v829 = vunpack.c.l.bf16 %v811
    %v830 = vunpack.c.h.bf16 %v811
    %v831 = vunpack.c.l.bf16 %v812
    %v832 = vunpack.c.h.bf16 %v812
    %v833 = vunpack.c.l.bf16 %v813
    %v834 = vunpack.c.h.bf16 %v813
    %v835 = vunpack.c.l.bf16 %v814
    %v836 = vunpack.c.h.bf16 %v814
    %v837 = vunpack.c.l.bf16 %v815
    %v838 = vunpack.c.h.bf16 %v815
    %v839 = vunpack.c.l.bf16 %v816
    %v840 = vunpack.c.h.bf16 %v816
    %v841 = vunpack.c.l.bf16 %v817
    %v842 = vunpack.c.h.bf16 %v817
    %v843 = vunpack.c.l.bf16 %v818
    %v844 = vunpack.c.h.bf16 %v818
    %v845 = vunpack.c.l.bf16 %v819
    %v846 = vunpack.c.h.bf16 %v819
    %v847 = vunpack.c.l.bf16 %v820
    %v848 = vunpack.c.h.bf16 %v820
    %v849 = vunpack.c.l.bf16 %v821
    %v850 = vunpack.c.h.bf16 %v821
    %v851 = vunpack.c.l.bf16 %v822
    %v852 = vunpack.c.h.bf16 %v822
    %v853 = vunpack.c.l.bf16 %v823
    %v854 = vunpack.c.h.bf16 %v823
    %v855 = vunpack.c.l.bf16 %v824
    %v856 = vunpack.c.h.bf16 %v824
    %v889 = vrot.slane %v825, 6
    %v890 = vrot.slane %v826, 6
    %v891 = vrot.slane %v827, 6
    %v892 = vrot.slane %v828, 6
    %v893 = vrot.slane %v829, 6
    %v894 = vrot.slane %v830, 6
    %v895 = vrot.slane %v831, 6
    %v896 = vrot.slane %v832, 6
    %v897 = vrot.slane %v833, 6
    %v898 = vrot.slane %v834, 6
    %v899 = vrot.slane %v835, 6
    %v900 = vrot.slane %v836, 6
    %v901 = vrot.slane %v837, 6
    %v902 = vrot.slane %v838, 6
    %v903 = vrot.slane %v839, 6
    %v904 = vrot.slane %v840, 6
    %v905 = vrot.slane %v841, 6
    %v906 = vrot.slane %v842, 6
    %v907 = vrot.slane %v843, 6
    %v908 = vrot.slane %v844, 6
    %v909 = vrot.slane %v845, 6
    %v910 = vrot.slane %v846, 6
    %v911 = vrot.slane %v847, 6
    %v912 = vrot.slane %v848, 6
    %v913 = vrot.slane %v849, 6
    %v914 = vrot.slane %v850, 6
    %v915 = vrot.slane %v851, 6
    %v916 = vrot.slane %v852, 6
    %v917 = vrot.slane %v853, 6
    %v918 = vrot.slane %v854, 6
    %v919 = vrot.slane %v855, 6
    %v920 = vrot.slane %v856, 6
    %v953 = vadd.f32 %v777, %v889
    %v954 = vadd.f32 %v778, %v890
    %v955 = vadd.f32 %v779, %v891
    %v956 = vadd.f32 %v780, %v892
    %v957 = vadd.f32 %v781, %v893
    %v958 = vadd.f32 %v782, %v894
    %v959 = vadd.f32 %v783, %v895
    %v960 = vadd.f32 %v784, %v896
    %v961 = vadd.f32 %v785, %v897
    %v962 = vadd.f32 %v786, %v898
    %v963 = vadd.f32 %v787, %v899
    %v964 = vadd.f32 %v788, %v900
    %v965 = vadd.f32 %v789, %v901
    %v966 = vadd.f32 %v790, %v902
    %v967 = vadd.f32 %v791, %v903
    %v968 = vadd.f32 %v792, %v904
    %v969 = vadd.f32 %v793, %v905
    %v970 = vadd.f32 %v794, %v906
    %v971 = vadd.f32 %v795, %v907
    %v972 = vadd.f32 %v796, %v908
    %v973 = vadd.f32 %v797, %v909
    %v974 = vadd.f32 %v798, %v910
    %v975 = vadd.f32 %v799, %v911
    %v976 = vadd.f32 %v800, %v912
    %v977 = vadd.f32 %v801, %v913
    %v978 = vadd.f32 %v802, %v914
    %v979 = vadd.f32 %v803, %v915
    %v980 = vadd.f32 %v804, %v916
    %v981 = vadd.f32 %v805, %v917
    %v982 = vadd.f32 %v806, %v918
    %v983 = vadd.f32 %v807, %v919
    %v984 = vadd.f32 %v808, %v920
    %v985 = vrot.slane %v825, 7
    %v986 = vrot.slane %v826, 7
    %v987 = vrot.slane %v827, 7
    %v988 = vrot.slane %v828, 7
    %v989 = vrot.slane %v829, 7
    %v990 = vrot.slane %v830, 7
    %v991 = vrot.slane %v831, 7
    %v992 = vrot.slane %v832, 7
    %v993 = vrot.slane %v833, 7
    %v994 = vrot.slane %v834, 7
    %v995 = vrot.slane %v835, 7
    %v996 = vrot.slane %v836, 7
    %v997 = vrot.slane %v837, 7
    %v998 = vrot.slane %v838, 7
    %v999 = vrot.slane %v839, 7
    %v1000 = vrot.slane %v840, 7
    %v1001 = vrot.slane %v841, 7
    %v1002 = vrot.slane %v842, 7
    %v1003 = vrot.slane %v843, 7
    %v1004 = vrot.slane %v844, 7
    %v1005 = vrot.slane %v845, 7
    %v1006 = vrot.slane %v846, 7
    %v1007 = vrot.slane %v847, 7
    %v1008 = vrot.slane %v848, 7
    %v1009 = vrot.slane %v849, 7
    %v1010 = vrot.slane %v850, 7
    %v1011 = vrot.slane %v851, 7
    %v1012 = vrot.slane %v852, 7
    %v1013 = vrot.slane %v853, 7
    %v1014 = vrot.slane %v854, 7
    %v1015 = vrot.slane %v855, 7
    %v1016 = vrot.slane %v856, 7
    %v1049 = vadd.f32 %v953, %v985
    %v1050 = vadd.f32 %v954, %v986
    %v1051 = vadd.f32 %v955, %v987
    %v1052 = vadd.f32 %v956, %v988
    %v1053 = vadd.f32 %v957, %v989
    %v1054 = vadd.f32 %v958, %v990
    %v1055 = vadd.f32 %v959, %v991
    %v1056 = vadd.f32 %v960, %v992
    %v1057 = vadd.f32 %v961, %v993
    %v1058 = vadd.f32 %v962, %v994
    %v1059 = vadd.f32 %v963, %v995
    %v1060 = vadd.f32 %v964, %v996
    %v1061 = vadd.f32 %v965, %v997
    %v1062 = vadd.f32 %v966, %v998
    %v1063 = vadd.f32 %v967, %v999
    %v1064 = vadd.f32 %v968, %v1000
    %v1065 = vadd.f32 %v969, %v1001
    %v1066 = vadd.f32 %v970, %v1002
    %v1067 = vadd.f32 %v971, %v1003
    %v1068 = vadd.f32 %v972, %v1004
    %v1069 = vadd.f32 %v973, %v1005
    %v1070 = vadd.f32 %v974, %v1006
    %v1071 = vadd.f32 %v975, %v1007
    %v1072 = vadd.f32 %v976, %v1008
    %v1073 = vadd.f32 %v977, %v1009
    %v1074 = vadd.f32 %v978, %v1010
    %v1075 = vadd.f32 %v979, %v1011
    %v1076 = vadd.f32 %v980, %v1012
    %v1077 = vadd.f32 %v981, %v1013
    %v1078 = vadd.f32 %v982, %v1014
    %v1079 = vadd.f32 %v983, %v1015
    %v1080 = vadd.f32 %v984, %v1016
    %v1081 = vmul.f32 %v1049, 0.125
    %v1082 = vmul.f32 %v1050, 0.125
    %v1083 = vmul.f32 %v1051, 0.125
    %v1084 = vmul.f32 %v1052, 0.125
    %v1085 = vmul.f32 %v1053, 0.125
    %v1086 = vmul.f32 %v1054, 0.125
    %v1087 = vmul.f32 %v1055, 0.125
    %v1088 = vmul.f32 %v1056, 0.125
    %v1089 = vmul.f32 %v1057, 0.125
    %v1090 = vmul.f32 %v1058, 0.125
    %v1091 = vmul.f32 %v1059, 0.125
    %v1092 = vmul.f32 %v1060, 0.125
    %v1093 = vmul.f32 %v1061, 0.125
    %v1094 = vmul.f32 %v1062, 0.125
    %v1095 = vmul.f32 %v1063, 0.125
    %v1096 = vmul.f32 %v1064, 0.125
    %v1097 = vmul.f32 %v1065, 0.125
    %v1098 = vmul.f32 %v1066, 0.125
    %v1099 = vmul.f32 %v1067, 0.125
    %v1100 = vmul.f32 %v1068, 0.125
    %v1101 = vmul.f32 %v1069, 0.125
    %v1102 = vmul.f32 %v1070, 0.125
    %v1103 = vmul.f32 %v1071, 0.125
    %v1104 = vmul.f32 %v1072, 0.125
    %v1105 = vmul.f32 %v1073, 0.125
    %v1106 = vmul.f32 %v1074, 0.125
    %v1107 = vmul.f32 %v1075, 0.125
    %v1108 = vmul.f32 %v1076, 0.125
    %v1109 = vmul.f32 %v1077, 0.125
    %v1110 = vmul.f32 %v1078, 0.125
    %v1111 = vmul.f32 %v1079, 0.125
    %v1112 = vmul.f32 %v1080, 0.125
    %v1113 = vpack.c.bf16 %v1081, %v1081
    %v1114 = vpack.c.bf16 %v1082, %v1082
    %v1115 = vpack.c.bf16 %v1083, %v1083
    %v1116 = vpack.c.bf16 %v1084, %v1084
    %v1117 = vpack.c.bf16 %v1085, %v1085
    %v1118 = vpack.c.bf16 %v1086, %v1086
    %v1119 = vpack.c.bf16 %v1087, %v1087
    %v1120 = vpack.c.bf16 %v1088, %v1088
    %v1121 = vpack.c.bf16 %v1089, %v1089
    %v1122 = vpack.c.bf16 %v1090, %v1090
    %v1123 = vpack.c.bf16 %v1091, %v1091
    %v1124 = vpack.c.bf16 %v1092, %v1092
    %v1125 = vpack.c.bf16 %v1093, %v1093
    %v1126 = vpack.c.bf16 %v1094, %v1094
    %v1127 = vpack.c.bf16 %v1095, %v1095
    %v1128 = vpack.c.bf16 %v1096, %v1096
    %v1129 = vpack.c.bf16 %v1097, %v1097
    %v1130 = vpack.c.bf16 %v1098, %v1098
    %v1131 = vpack.c.bf16 %v1099, %v1099
    %v1132 = vpack.c.bf16 %v1100, %v1100
    %v1133 = vpack.c.bf16 %v1101, %v1101
    %v1134 = vpack.c.bf16 %v1102, %v1102
    %v1135 = vpack.c.bf16 %v1103, %v1103
    %v1136 = vpack.c.bf16 %v1104, %v1104
    %v1137 = vpack.c.bf16 %v1105, %v1105
    %v1138 = vpack.c.bf16 %v1106, %v1106
    %v1139 = vpack.c.bf16 %v1107, %v1107
    %v1140 = vpack.c.bf16 %v1108, %v1108
    %v1141 = vpack.c.bf16 %v1109, %v1109
    %v1142 = vpack.c.bf16 %v1110, %v1110
    %v1143 = vpack.c.bf16 %v1111, %v1111
    %v1144 = vpack.c.bf16 %v1112, %v1112
    %v1145 = vld [vmem:[#allocation5] sm:$0xff]
    %v1146 = vld [vmem:[#allocation5 + $0x8] sm:$0xff]
    %v1147 = vld [vmem:[#allocation5 + $0x10] sm:$0xff]
    %v1148 = vld [vmem:[#allocation5 + $0x18] sm:$0xff]
    %v1149 = vld [vmem:[#allocation5 + $0x20] sm:$0xff]
    %v1150 = vld [vmem:[#allocation5 + $0x28] sm:$0xff]
    %v1151 = vld [vmem:[#allocation5 + $0x30] sm:$0xff]
    %v1152 = vld [vmem:[#allocation5 + $0x38] sm:$0xff]
    %v1153 = vld [vmem:[#allocation5 + $0x40] sm:$0xff]
    %v1154 = vld [vmem:[#allocation5 + $0x48] sm:$0xff]
    %v1155 = vld [vmem:[#allocation5 + $0x50] sm:$0xff]
    %v1156 = vld [vmem:[#allocation5 + $0x58] sm:$0xff]
    %v1157 = vld [vmem:[#allocation5 + $0x60] sm:$0xff]
    %v1158 = vld [vmem:[#allocation5 + $0x68] sm:$0xff]
    %v1159 = vld [vmem:[#allocation5 + $0x70] sm:$0xff]
    %v1160 = vld [vmem:[#allocation5 + $0x78] sm:$0xff]
    %v1161 = vld [vmem:[#allocation5 + $0x80] sm:$0xff]
    %v1162 = vld [vmem:[#allocation5 + $0x88] sm:$0xff]
    %v1163 = vld [vmem:[#allocation5 + $0x90] sm:$0xff]
    %v1164 = vld [vmem:[#allocation5 + $0x98] sm:$0xff]
    %v1165 = vld [vmem:[#allocation5 + $0xa0] sm:$0xff]
    %v1166 = vld [vmem:[#allocation5 + $0xa8] sm:$0xff]
    %v1167 = vld [vmem:[#allocation5 + $0xb0] sm:$0xff]
    %v1168 = vld [vmem:[#allocation5 + $0xb8] sm:$0xff]
    %v1169 = vld [vmem:[#allocation5 + $0xc0] sm:$0xff]
    %v1170 = vld [vmem:[#allocation5 + $0xc8] sm:$0xff]
    %v1171 = vld [vmem:[#allocation5 + $0xd0] sm:$0xff]
    %v1172 = vld [vmem:[#allocation5 + $0xd8] sm:$0xff]
    %v1173 = vld [vmem:[#allocation5 + $0xe0] sm:$0xff]
    %v1174 = vld [vmem:[#allocation5 + $0xe8] sm:$0xff]
    %v1175 = vld [vmem:[#allocation5 + $0xf0] sm:$0xff]
    %v1176 = vld [vmem:[#allocation5 + $0xf8] sm:$0xff]
    %v1177 = vld [vmem:[#allocation5 + $0x100] sm:$0xff]
    %v1178 = vld [vmem:[#allocation5 + $0x108] sm:$0xff]
    %v1179 = vld [vmem:[#allocation5 + $0x110] sm:$0xff]
    %v1180 = vld [vmem:[#allocation5 + $0x118] sm:$0xff]
    %v1181 = vld [vmem:[#allocation5 + $0x120] sm:$0xff]
    %v1182 = vld [vmem:[#allocation5 + $0x128] sm:$0xff]
    %v1183 = vld [vmem:[#allocation5 + $0x130] sm:$0xff]
    %v1184 = vld [vmem:[#allocation5 + $0x138] sm:$0xff]
    %v1185 = vld [vmem:[#allocation5 + $0x140] sm:$0xff]
    %v1186 = vld [vmem:[#allocation5 + $0x148] sm:$0xff]
    %v1187 = vld [vmem:[#allocation5 + $0x150] sm:$0xff]
    %v1188 = vld [vmem:[#allocation5 + $0x158] sm:$0xff]
    %v1189 = vld [vmem:[#allocation5 + $0x160] sm:$0xff]
    %v1190 = vld [vmem:[#allocation5 + $0x168] sm:$0xff]
    %v1191 = vld [vmem:[#allocation5 + $0x170] sm:$0xff]
    %v1192 = vld [vmem:[#allocation5 + $0x178] sm:$0xff]
    %v1193 = vld [vmem:[#allocation5 + $0x180] sm:$0xff]
    %v1194 = vld [vmem:[#allocation5 + $0x188] sm:$0xff]
    %v1195 = vld [vmem:[#allocation5 + $0x190] sm:$0xff]
    %v1196 = vld [vmem:[#allocation5 + $0x198] sm:$0xff]
    %v1197 = vld [vmem:[#allocation5 + $0x1a0] sm:$0xff]
    %v1198 = vld [vmem:[#allocation5 + $0x1a8] sm:$0xff]
    %v1199 = vld [vmem:[#allocation5 + $0x1b0] sm:$0xff]
    %v1200 = vld [vmem:[#allocation5 + $0x1b8] sm:$0xff]
    %v1201 = vld [vmem:[#allocation5 + $0x1c0] sm:$0xff]
    %v1202 = vld [vmem:[#allocation5 + $0x1c8] sm:$0xff]
    %v1203 = vld [vmem:[#allocation5 + $0x1d0] sm:$0xff]
    %v1204 = vld [vmem:[#allocation5 + $0x1d8] sm:$0xff]
    %v1205 = vld [vmem:[#allocation5 + $0x1e0] sm:$0xff]
    %v1206 = vld [vmem:[#allocation5 + $0x1e8] sm:$0xff]
    %v1207 = vld [vmem:[#allocation5 + $0x1f0] sm:$0xff]
    %v1208 = vld [vmem:[#allocation5 + $0x1f8] sm:$0xff]
    %v1209 = vld [vmem:[%s2] sm:$0xf]
    %v1211 = vlaneseq
    %v1212 = vshrl.u32 %v1211, 7
    %v1213 = vsub.s32 0, %v1212
    %v1214 = vrot.slane %v1209, %v1213
    %v1215 = vlaneseq
    %v1216 = vshrl.u32 %v1215, 7
    %v1217 = vsub.s32 1, %v1216
    %v1218 = vrot.slane %v1209, %v1217
    %v1219 = vlaneseq
    %v1220 = vshrl.u32 %v1219, 7
    %v1221 = vsub.s32 2, %v1220
    %v1222 = vrot.slane %v1209, %v1221
    %v1223 = vlaneseq
    %v1224 = vshrl.u32 %v1223, 7
    %v1225 = vsub.s32 3, %v1224
    %v1226 = vrot.slane %v1209, %v1225
    %v1263 = vunpack.c.l.b16 %v1113
    %v1264 = vunpack.c.l.b16 %v1114
    %v1265 = vunpack.c.l.b16 %v1115
    %v1266 = vunpack.c.l.b16 %v1116
    %v1267 = vunpack.c.l.b16 %v1117
    %v1268 = vunpack.c.l.b16 %v1118
    %v1269 = vunpack.c.l.b16 %v1119
    %v1270 = vunpack.c.l.b16 %v1120
    %v1271 = vunpack.c.l.b16 %v1121
    %v1272 = vunpack.c.l.b16 %v1122
    %v1273 = vunpack.c.l.b16 %v1123
    %v1274 = vunpack.c.l.b16 %v1124
    %v1275 = vunpack.c.l.b16 %v1125
    %v1276 = vunpack.c.l.b16 %v1126
    %v1277 = vunpack.c.l.b16 %v1127
    %v1278 = vunpack.c.l.b16 %v1128
    %v1279 = vunpack.c.l.b16 %v1129
    %v1280 = vunpack.c.l.b16 %v1130
    %v1281 = vunpack.c.l.b16 %v1131
    %v1282 = vunpack.c.l.b16 %v1132
    %v1283 = vunpack.c.l.b16 %v1133
    %v1284 = vunpack.c.l.b16 %v1134
    %v1285 = vunpack.c.l.b16 %v1135
    %v1286 = vunpack.c.l.b16 %v1136
    %v1287 = vunpack.c.l.b16 %v1137
    %v1288 = vunpack.c.l.b16 %v1138
    %v1289 = vunpack.c.l.b16 %v1139
    %v1290 = vunpack.c.l.b16 %v1140
    %v1291 = vunpack.c.l.b16 %v1141
    %v1292 = vunpack.c.l.b16 %v1142
    %v1293 = vunpack.c.l.b16 %v1143
    %v1294 = vunpack.c.l.b16 %v1144
    %v1295 = vrot.slane %v1265, 7
    %vm1296 = vcmask 1041409
    %v1297 = vsel %vm1296, %v1295, %v1263
    %v1298 = vrot.slane %v1267, 6
    %vm1299 = vcmask 1042434
    %v1300 = vsel %vm1299, %v1298, %v1297
    %v1301 = vrot.slane %v1269, 5
    %vm1302 = vcmask 1043459
    %v1303 = vsel %vm1302, %v1301, %v1300
    %v1304 = vrot.slane %v1271, 4
    %vm1305 = vcmask 1044484
    %v1306 = vsel %vm1305, %v1304, %v1303
    %v1307 = vrot.slane %v1273, 3
    %vm1308 = vcmask 1045509
    %v1309 = vsel %vm1308, %v1307, %v1306
    %v1310 = vrot.slane %v1275, 2
    %vm1311 = vcmask 1046534
    %v1312 = vsel %vm1311, %v1310, %v1309
    %v1313 = vrot.slane %v1277, 1
    %vm1314 = vcmask 1047559
    %v1315 = vsel %vm1314, %v1313, %v1312
    %v1316 = vrot.slane %v1266, 7
    %v1317 = vsel %vm1296, %v1316, %v1264
    %v1318 = vrot.slane %v1268, 6
    %v1319 = vsel %vm1299, %v1318, %v1317
    %v1320 = vrot.slane %v1270, 5
    %v1321 = vsel %vm1302, %v1320, %v1319
    %v1322 = vrot.slane %v1272, 4
    %v1323 = vsel %vm1305, %v1322, %v1321
    %v1324 = vrot.slane %v1274, 3
    %v1325 = vsel %vm1308, %v1324, %v1323
    %v1326 = vrot.slane %v1276, 2
    %v1327 = vsel %vm1311, %v1326, %v1325
    %v1328 = vrot.slane %v1278, 1
    %v1329 = vsel %vm1314, %v1328, %v1327
    %v1330 = vrot.slane %v1281, 7
    %v1331 = vsel %vm1296, %v1330, %v1279
    %v1332 = vrot.slane %v1283, 6
    %v1333 = vsel %vm1299, %v1332, %v1331
    %v1334 = vrot.slane %v1285, 5
    %v1335 = vsel %vm1302, %v1334, %v1333
    %v1336 = vrot.slane %v1287, 4
    %v1337 = vsel %vm1305, %v1336, %v1335
    %v1338 = vrot.slane %v1289, 3
    %v1339 = vsel %vm1308, %v1338, %v1337
    %v1340 = vrot.slane %v1291, 2
    %v1341 = vsel %vm1311, %v1340, %v1339
    %v1342 = vrot.slane %v1293, 1
    %v1343 = vsel %vm1314, %v1342, %v1341
    %v1344 = vrot.slane %v1282, 7
    %v1345 = vsel %vm1296, %v1344, %v1280
    %v1346 = vrot.slane %v1284, 6
    %v1347 = vsel %vm1299, %v1346, %v1345
    %v1348 = vrot.slane %v1286, 5
    %v1349 = vsel %vm1302, %v1348, %v1347
    %v1350 = vrot.slane %v1288, 4
    %v1351 = vsel %vm1305, %v1350, %v1349
    %v1352 = vrot.slane %v1290, 3
    %v1353 = vsel %vm1308, %v1352, %v1351
    %v1354 = vrot.slane %v1292, 2
    %v1355 = vsel %vm1311, %v1354, %v1353
    %v1356 = vrot.slane %v1294, 1
    %v1357 = vsel %vm1314, %v1356, %v1355
    %v1358 = vpack.c.b16 %v1343, %v1315
    %v1359 = vpack.c.b16 %v1357, %v1329
    %v1426 = vunpack.c.l.b16 %v1145
    %v1427 = vunpack.c.h.b16 %v1145
    %v1428 = vunpack.c.l.b16 %v1146
    %v1429 = vunpack.c.h.b16 %v1146
    %v1430 = vunpack.c.l.b16 %v1147
    %v1431 = vunpack.c.h.b16 %v1147
    %v1432 = vunpack.c.l.b16 %v1148
    %v1433 = vunpack.c.h.b16 %v1148
    %v1434 = vunpack.c.l.b16 %v1149
    %v1435 = vunpack.c.h.b16 %v1149
    %v1436 = vunpack.c.l.b16 %v1150
    %v1437 = vunpack.c.h.b16 %v1150
    %v1438 = vunpack.c.l.b16 %v1151
    %v1439 = vunpack.c.h.b16 %v1151
    %v1440 = vunpack.c.l.b16 %v1152
    %v1441 = vunpack.c.h.b16 %v1152
    %v1442 = vunpack.c.l.b16 %v1153
    %v1443 = vunpack.c.h.b16 %v1153
    %v1444 = vunpack.c.l.b16 %v1154
    %v1445 = vunpack.c.h.b16 %v1154
    %v1446 = vunpack.c.l.b16 %v1155
    %v1447 = vunpack.c.h.b16 %v1155
    %v1448 = vunpack.c.l.b16 %v1156
    %v1449 = vunpack.c.h.b16 %v1156
    %v1450 = vunpack.c.l.b16 %v1157
    %v1451 = vunpack.c.h.b16 %v1157
    %v1452 = vunpack.c.l.b16 %v1158
    %v1453 = vunpack.c.h.b16 %v1158
    %v1454 = vunpack.c.l.b16 %v1159
    %v1455 = vunpack.c.h.b16 %v1159
    %v1456 = vunpack.c.l.b16 %v1160
    %v1457 = vunpack.c.h.b16 %v1160
    %v1458 = vunpack.c.l.b16 %v1161
    %v1459 = vunpack.c.h.b16 %v1161
    %v1460 = vunpack.c.l.b16 %v1162
    %v1461 = vunpack.c.h.b16 %v1162
    %v1462 = vunpack.c.l.b16 %v1163
    %v1463 = vunpack.c.h.b16 %v1163
    %v1464 = vunpack.c.l.b16 %v1164
    %v1465 = vunpack.c.h.b16 %v1164
    %v1466 = vunpack.c.l.b16 %v1165
    %v1467 = vunpack.c.h.b16 %v1165
    %v1468 = vunpack.c.l.b16 %v1166
    %v1469 = vunpack.c.h.b16 %v1166
    %v1470 = vunpack.c.l.b16 %v1167
    %v1471 = vunpack.c.h.b16 %v1167
    %v1472 = vunpack.c.l.b16 %v1168
    %v1473 = vunpack.c.h.b16 %v1168
    %v1474 = vunpack.c.l.b16 %v1169
    %v1475 = vunpack.c.h.b16 %v1169
    %v1476 = vunpack.c.l.b16 %v1170
    %v1477 = vunpack.c.h.b16 %v1170
    %v1478 = vunpack.c.l.b16 %v1171
    %v1479 = vunpack.c.h.b16 %v1171
    %v1480 = vunpack.c.l.b16 %v1172
    %v1481 = vunpack.c.h.b16 %v1172
    %v1482 = vunpack.c.l.b16 %v1173
    %v1483 = vunpack.c.h.b16 %v1173
    %v1484 = vunpack.c.l.b16 %v1174
    %v1485 = vunpack.c.h.b16 %v1174
    %v1486 = vunpack.c.l.b16 %v1175
    %v1487 = vunpack.c.h.b16 %v1175
    %v1488 = vunpack.c.l.b16 %v1176
    %v1489 = vunpack.c.h.b16 %v1176
    %v1490 = vunpack.c.l.b16 %v1177
    %v1491 = vunpack.c.h.b16 %v1177
    %v1492 = vunpack.c.l.b16 %v1178
    %v1493 = vunpack.c.h.b16 %v1178
    %v1494 = vunpack.c.l.b16 %v1179
    %v1495 = vunpack.c.h.b16 %v1179
    %v1496 = vunpack.c.l.b16 %v1180
    %v1497 = vunpack.c.h.b16 %v1180
    %v1498 = vunpack.c.l.b16 %v1181
    %v1499 = vunpack.c.h.b16 %v1181
    %v1500 = vunpack.c.l.b16 %v1182
    %v1501 = vunpack.c.h.b16 %v1182
    %v1502 = vunpack.c.l.b16 %v1183
    %v1503 = vunpack.c.h.b16 %v1183
    %v1504 = vunpack.c.l.b16 %v1184
    %v1505 = vunpack.c.h.b16 %v1184
    %v1506 = vunpack.c.l.b16 %v1185
    %v1507 = vunpack.c.h.b16 %v1185
    %v1508 = vunpack.c.l.b16 %v1186
    %v1509 = vunpack.c.h.b16 %v1186
    %v1510 = vunpack.c.l.b16 %v1187
    %v1511 = vunpack.c.h.b16 %v1187
    %v1512 = vunpack.c.l.b16 %v1188
    %v1513 = vunpack.c.h.b16 %v1188
    %v1514 = vunpack.c.l.b16 %v1189
    %v1515 = vunpack.c.h.b16 %v1189
    %v1516 = vunpack.c.l.b16 %v1190
    %v1517 = vunpack.c.h.b16 %v1190
    %v1518 = vunpack.c.l.b16 %v1191
    %v1519 = vunpack.c.h.b16 %v1191
    %v1520 = vunpack.c.l.b16 %v1192
    %v1521 = vunpack.c.h.b16 %v1192
    %v1522 = vunpack.c.l.b16 %v1193
    %v1523 = vunpack.c.h.b16 %v1193
    %v1524 = vunpack.c.l.b16 %v1194
    %v1525 = vunpack.c.h.b16 %v1194
    %v1526 = vunpack.c.l.b16 %v1195
    %v1527 = vunpack.c.h.b16 %v1195
    %v1528 = vunpack.c.l.b16 %v1196
    %v1529 = vunpack.c.h.b16 %v1196
    %v1530 = vunpack.c.l.b16 %v1197
    %v1531 = vunpack.c.h.b16 %v1197
    %v1532 = vunpack.c.l.b16 %v1198
    %v1533 = vunpack.c.h.b16 %v1198
    %v1534 = vunpack.c.l.b16 %v1199
    %v1535 = vunpack.c.h.b16 %v1199
    %v1536 = vunpack.c.l.b16 %v1200
    %v1537 = vunpack.c.h.b16 %v1200
    %v1538 = vunpack.c.l.b16 %v1201
    %v1539 = vunpack.c.h.b16 %v1201
    %v1540 = vunpack.c.l.b16 %v1202
    %v1541 = vunpack.c.h.b16 %v1202
    %v1542 = vunpack.c.l.b16 %v1203
    %v1543 = vunpack.c.h.b16 %v1203
    %v1544 = vunpack.c.l.b16 %v1204
    %v1545 = vunpack.c.h.b16 %v1204
    %v1546 = vunpack.c.l.b16 %v1205
    %v1547 = vunpack.c.h.b16 %v1205
    %v1548 = vunpack.c.l.b16 %v1206
    %v1549 = vunpack.c.h.b16 %v1206
    %v1550 = vunpack.c.l.b16 %v1207
    %v1551 = vunpack.c.h.b16 %v1207
    %v1552 = vunpack.c.l.b16 %v1208
    %v1553 = vunpack.c.h.b16 %v1208
    %v1554 = vpack.c.b16 %v1430, %v1426
    %v1555 = vpack.c.b16 %v1431, %v1427
    %v1556 = vpack.c.b16 %v1432, %v1428
    %v1557 = vpack.c.b16 %v1433, %v1429
    %v1558 = vpack.c.b16 %v1438, %v1434
    %v1559 = vpack.c.b16 %v1439, %v1435
    %v1560 = vpack.c.b16 %v1440, %v1436
    %v1561 = vpack.c.b16 %v1441, %v1437
    %v1562 = vpack.c.b16 %v1446, %v1442
    %v1563 = vpack.c.b16 %v1447, %v1443
    %v1564 = vpack.c.b16 %v1448, %v1444
    %v1565 = vpack.c.b16 %v1449, %v1445
    %v1566 = vpack.c.b16 %v1454, %v1450
    %v1567 = vpack.c.b16 %v1455, %v1451
    %v1568 = vpack.c.b16 %v1456, %v1452
    %v1569 = vpack.c.b16 %v1457, %v1453
    %v1570 = vpack.c.b16 %v1462, %v1458
    %v1571 = vpack.c.b16 %v1463, %v1459
    %v1572 = vpack.c.b16 %v1464, %v1460
    %v1573 = vpack.c.b16 %v1465, %v1461
    %v1574 = vpack.c.b16 %v1470, %v1466
    %v1575 = vpack.c.b16 %v1471, %v1467
    %v1576 = vpack.c.b16 %v1472, %v1468
    %v1577 = vpack.c.b16 %v1473, %v1469
    %v1578 = vpack.c.b16 %v1478, %v1474
    %v1579 = vpack.c.b16 %v1479, %v1475
    %v1580 = vpack.c.b16 %v1480, %v1476
    %v1581 = vpack.c.b16 %v1481, %v1477
    %v1582 = vpack.c.b16 %v1486, %v1482
    %v1583 = vpack.c.b16 %v1487, %v1483
    %v1584 = vpack.c.b16 %v1488, %v1484
    %v1585 = vpack.c.b16 %v1489, %v1485
    %v1586 = vpack.c.b16 %v1494, %v1490
    %v1587 = vpack.c.b16 %v1495, %v1491
    %v1588 = vpack.c.b16 %v1496, %v1492
    %v1589 = vpack.c.b16 %v1497, %v1493
    %v1590 = vpack.c.b16 %v1502, %v1498
    %v1591 = vpack.c.b16 %v1503, %v1499
    %v1592 = vpack.c.b16 %v1504, %v1500
    %v1593 = vpack.c.b16 %v1505, %v1501
    %v1594 = vpack.c.b16 %v1510, %v1506
    %v1595 = vpack.c.b16 %v1511, %v1507
    %v1596 = vpack.c.b16 %v1512, %v1508
    %v1597 = vpack.c.b16 %v1513, %v1509
    %v1598 = vpack.c.b16 %v1518, %v1514
    %v1599 = vpack.c.b16 %v1519, %v1515
    %v1600 = vpack.c.b16 %v1520, %v1516
    %v1601 = vpack.c.b16 %v1521, %v1517
    %v1602 = vpack.c.b16 %v1526, %v1522
    %v1603 = vpack.c.b16 %v1527, %v1523
    %v1604 = vpack.c.b16 %v1528, %v1524
    %v1605 = vpack.c.b16 %v1529, %v1525
    %v1606 = vpack.c.b16 %v1534, %v1530
    %v1607 = vpack.c.b16 %v1535, %v1531
    %v1608 = vpack.c.b16 %v1536, %v1532
    %v1609 = vpack.c.b16 %v1537, %v1533
    %v1610 = vpack.c.b16 %v1542, %v1538
    %v1611 = vpack.c.b16 %v1543, %v1539
    %v1612 = vpack.c.b16 %v1544, %v1540
    %v1613 = vpack.c.b16 %v1545, %v1541
    %v1614 = vpack.c.b16 %v1550, %v1546
    %v1615 = vpack.c.b16 %v1551, %v1547
    %v1616 = vpack.c.b16 %v1552, %v1548
    %v1617 = vpack.c.b16 %v1553, %v1549
    %1682 = vmatprep.subr.bf16.mxu0 %v1555
    %1683 = vmatpush1.bf16.msra.mxu0 %v1554
    %1684 = vmatprep.subr.bf16.mxu0 %v1559
    %1685 = vmatpush1.bf16.msra.mxu0 %v1558
    %1686 = vmatprep.subr.bf16.mxu0 %v1563
    %1687 = vmatpush1.bf16.msra.mxu0 %v1562
    %1688 = vmatprep.subr.bf16.mxu0 %v1567
    %1689 = vmatpush1.bf16.msra.mxu0 %v1566
    %1690 = vmatprep.subr.bf16.mxu0 %v1571
    %1691 = vmatpush1.bf16.msra.mxu0 %v1570
    %1692 = vmatprep.subr.bf16.mxu0 %v1575
    %1693 = vmatpush1.bf16.msra.mxu0 %v1574
    %1694 = vmatprep.subr.bf16.mxu0 %v1579
    %1695 = vmatpush1.bf16.msra.mxu0 %v1578
    %1696 = vmatprep.subr.bf16.mxu0 %v1583
    %1697 = vmatpush1.bf16.msra.mxu0 %v1582
    %1698 = vmatprep.subr.bf16.mxu0 %v1587
    %1699 = vmatpush1.bf16.msra.mxu0 %v1586
    %1700 = vmatprep.subr.bf16.mxu0 %v1591
    %1701 = vmatpush1.bf16.msra.mxu0 %v1590
    %1702 = vmatprep.subr.bf16.mxu0 %v1595
    %1703 = vmatpush1.bf16.msra.mxu0 %v1594
    %1704 = vmatprep.subr.bf16.mxu0 %v1599
    %1705 = vmatpush1.bf16.msra.mxu0 %v1598
    %1706 = vmatprep.subr.bf16.mxu0 %v1603
    %1707 = vmatpush1.bf16.msra.mxu0 %v1602
    %1708 = vmatprep.subr.bf16.mxu0 %v1607
    %1709 = vmatpush1.bf16.msra.mxu0 %v1606
    %1710 = vmatprep.subr.bf16.mxu0 %v1611
    %1711 = vmatpush1.bf16.msra.mxu0 %v1610
    %1712 = vmatprep.subr.bf16.mxu0 %v1615
    %1713 = vmatpush1.bf16.msra.mxu0 %v1614
    %1714 = vmatprep.mubr.bf16.mxu0 %v1359
    %1715 = vmatmul.mubr.bf16.gmra.mrb[0].mxu0 %v1358
    %v1716 = vpop.f32.mrb[0].mxu0
    %v1717 = vadd.f32 %v1214, %v1716
    %v1718 = vpop.f32.mrb[0].mxu0
    %v1719 = vadd.f32 %v1218, %v1718
    %v1720 = vpop.f32.mrb[0].mxu0
    %v1721 = vadd.f32 %v1214, %v1720
    %v1722 = vpop.f32.mrb[0].mxu0
    %v1723 = vadd.f32 %v1218, %v1722
    %1724 = vdwg.mxu0
    %1725 = vmatprep.subr.bf16.mxu0 %v1557
    %1726 = vmatpush1.bf16.msra.mxu0 %v1556
    %1727 = vmatprep.subr.bf16.mxu0 %v1561
    %1728 = vmatpush1.bf16.msra.mxu0 %v1560
    %1729 = vmatprep.subr.bf16.mxu0 %v1565
    %1730 = vmatpush1.bf16.msra.mxu0 %v1564
    %1731 = vmatprep.subr.bf16.mxu0 %v1569
    %1732 = vmatpush1.bf16.msra.mxu0 %v1568
    %1733 = vmatprep.subr.bf16.mxu0 %v1573
    %1734 = vmatpush1.bf16.msra.mxu0 %v1572
    %1735 = vmatprep.subr.bf16.mxu0 %v1577
    %1736 = vmatpush1.bf16.msra.mxu0 %v1576
    %1737 = vmatprep.subr.bf16.mxu0 %v1581
    %1738 = vmatpush1.bf16.msra.mxu0 %v1580
    %1739 = vmatprep.subr.bf16.mxu0 %v1585
    %1740 = vmatpush1.bf16.msra.mxu0 %v1584
    %1741 = vmatprep.subr.bf16.mxu0 %v1589
    %1742 = vmatpush1.bf16.msra.mxu0 %v1588
    %1743 = vmatprep.subr.bf16.mxu0 %v1593
    %1744 = vmatpush1.bf16.msra.mxu0 %v1592
    %1745 = vmatprep.subr.bf16.mxu0 %v1597
    %1746 = vmatpush1.bf16.msra.mxu0 %v1596
    %1747 = vmatprep.subr.bf16.mxu0 %v1601
    %1748 = vmatpush1.bf16.msra.mxu0 %v1600
    %1749 = vmatprep.subr.bf16.mxu0 %v1605
    %1750 = vmatpush1.bf16.msra.mxu0 %v1604
    %1751 = vmatprep.subr.bf16.mxu0 %v1609
    %1752 = vmatpush1.bf16.msra.mxu0 %v1608
    %1753 = vmatprep.subr.bf16.mxu0 %v1613
    %1754 = vmatpush1.bf16.msra.mxu0 %v1612
    %1755 = vmatprep.subr.bf16.mxu0 %v1617
    %1756 = vmatpush1.bf16.msra.mxu0 %v1616
    %1757 = vmatprep.mubr.bf16.mxu0 %v1359
    %1758 = vmatmul.mubr.bf16.gmra.mrb[0].mxu0 %v1358
    %v1759 = vpop.f32.mrb[0].mxu0
    %v1760 = vadd.f32 %v1222, %v1759
    %v1761 = vpop.f32.mrb[0].mxu0
    %v1762 = vadd.f32 %v1226, %v1761
    %v1763 = vpop.f32.mrb[0].mxu0
    %v1764 = vadd.f32 %v1222, %v1763
    %v1765 = vpop.f32.mrb[0].mxu0
    %v1766 = vadd.f32 %v1226, %v1765
    %1767 = vdwg.mxu0
    %v1768 = vmax.f32 %v1717, 0.0
    %v1769 = vmax.f32 %v1719, 0.0
    %v1770 = vmax.f32 %v1760, 0.0
    %v1771 = vmax.f32 %v1762, 0.0
    %v1772 = vmax.f32 %v1721, 0.0
    %v1773 = vmax.f32 %v1723, 0.0
    %v1774 = vmax.f32 %v1764, 0.0
    %v1775 = vmax.f32 %v1766, 0.0
    %v1776 = vpack.c.bf16 %v1772, %v1768
    %v1777 = vpack.c.bf16 %v1773, %v1769
    %v1778 = vpack.c.bf16 %v1774, %v1770
    %v1779 = vpack.c.bf16 %v1775, %v1771
    %v1780 = vld [vmem:[#allocation7] sm:$0xff]
    %v1781 = vld [vmem:[#allocation7 + $0x8] sm:$0xff]
    %v1782 = vld [vmem:[#allocation7 + $0x10] sm:$0xff]
    %v1783 = vld [vmem:[#allocation7 + $0x18] sm:$0xff]
    %v1784 = vld [vmem:[#allocation7 + $0x20] sm:$0xff]
    %v1785 = vld [vmem:[#allocation7 + $0x28] sm:$0xff]
    %v1786 = vld [vmem:[#allocation7 + $0x30] sm:$0xff]
    %v1787 = vld [vmem:[#allocation7 + $0x38] sm:$0xff]
    %v1788 = vld [vmem:[#allocation7 + $0x40] sm:$0xff]
    %v1789 = vld [vmem:[#allocation7 + $0x48] sm:$0xff]
    %v1790 = vld [vmem:[#allocation7 + $0x50] sm:$0xff]
    %v1791 = vld [vmem:[#allocation7 + $0x58] sm:$0xff]
    %v1792 = vld [vmem:[#allocation7 + $0x60] sm:$0xff]
    %v1793 = vld [vmem:[#allocation7 + $0x68] sm:$0xff]
    %v1794 = vld [vmem:[#allocation7 + $0x70] sm:$0xff]
    %v1795 = vld [vmem:[#allocation7 + $0x78] sm:$0xff]
    %v1796 = vld [vmem:[#allocation7 + $0x80] sm:$0xff]
    %v1797 = vld [vmem:[#allocation7 + $0x88] sm:$0xff]
    %v1798 = vld [vmem:[#allocation7 + $0x90] sm:$0xff]
    %v1799 = vld [vmem:[#allocation7 + $0x98] sm:$0xff]
    %v1800 = vld [vmem:[#allocation7 + $0xa0] sm:$0xff]
    %v1801 = vld [vmem:[#allocation7 + $0xa8] sm:$0xff]
    %v1802 = vld [vmem:[#allocation7 + $0xb0] sm:$0xff]
    %v1803 = vld [vmem:[#allocation7 + $0xb8] sm:$0xff]
    %v1804 = vld [vmem:[#allocation7 + $0xc0] sm:$0xff]
    %v1805 = vld [vmem:[#allocation7 + $0xc8] sm:$0xff]
    %v1806 = vld [vmem:[#allocation7 + $0xd0] sm:$0xff]
    %v1807 = vld [vmem:[#allocation7 + $0xd8] sm:$0xff]
    %v1808 = vld [vmem:[#allocation7 + $0xe0] sm:$0xff]
    %v1809 = vld [vmem:[#allocation7 + $0xe8] sm:$0xff]
    %v1810 = vld [vmem:[#allocation7 + $0xf0] sm:$0xff]
    %v1811 = vld [vmem:[#allocation7 + $0xf8] sm:$0xff]
    %v1812 = vld [vmem:[#allocation7 + $0x100] sm:$0xff]
    %v1813 = vld [vmem:[#allocation7 + $0x108] sm:$0xff]
    %v1814 = vld [vmem:[#allocation7 + $0x110] sm:$0xff]
    %v1815 = vld [vmem:[#allocation7 + $0x118] sm:$0xff]
    %v1816 = vld [vmem:[#allocation7 + $0x120] sm:$0xff]
    %v1817 = vld [vmem:[#allocation7 + $0x128] sm:$0xff]
    %v1818 = vld [vmem:[#allocation7 + $0x130] sm:$0xff]
    %v1819 = vld [vmem:[#allocation7 + $0x138] sm:$0xff]
    %v1820 = vld [vmem:[#allocation7 + $0x140] sm:$0xff]
    %v1821 = vld [vmem:[#allocation7 + $0x148] sm:$0xff]
    %v1822 = vld [vmem:[#allocation7 + $0x150] sm:$0xff]
    %v1823 = vld [vmem:[#allocation7 + $0x158] sm:$0xff]
    %v1824 = vld [vmem:[#allocation7 + $0x160] sm:$0xff]
    %v1825 = vld [vmem:[#allocation7 + $0x168] sm:$0xff]
    %v1826 = vld [vmem:[#allocation7 + $0x170] sm:$0xff]
    %v1827 = vld [vmem:[#allocation7 + $0x178] sm:$0xff]
    %v1828 = vld [vmem:[#allocation7 + $0x180] sm:$0xff]
    %v1829 = vld [vmem:[#allocation7 + $0x188] sm:$0xff]
    %v1830 = vld [vmem:[#allocation7 + $0x190] sm:$0xff]
    %v1831 = vld [vmem:[#allocation7 + $0x198] sm:$0xff]
    %v1832 = vld [vmem:[#allocation7 + $0x1a0] sm:$0xff]
    %v1833 = vld [vmem:[#allocation7 + $0x1a8] sm:$0xff]
    %v1834 = vld [vmem:[#allocation7 + $0x1b0] sm:$0xff]
    %v1835 = vld [vmem:[#allocation7 + $0x1b8] sm:$0xff]
    %v1836 = vld [vmem:[#allocation7 + $0x1c0] sm:$0xff]
    %v1837 = vld [vmem:[#allocation7 + $0x1c8] sm:$0xff]
    %v1838 = vld [vmem:[#allocation7 + $0x1d0] sm:$0xff]
    %v1839 = vld [vmem:[#allocation7 + $0x1d8] sm:$0xff]
    %v1840 = vld [vmem:[#allocation7 + $0x1e0] sm:$0xff]
    %v1841 = vld [vmem:[#allocation7 + $0x1e8] sm:$0xff]
    %v1842 = vld [vmem:[#allocation7 + $0x1f0] sm:$0xff]
    %v1843 = vld [vmem:[#allocation7 + $0x1f8] sm:$0xff]
    %v1844 = vld [vmem:[%s4] sm:$0x3]
    %v1846 = vlaneseq
    %v1847 = vshrl.u32 %v1846, 7
    %v1848 = vsub.s32 0, %v1847
    %v1849 = vrot.slane %v1844, %v1848
    %v1850 = vlaneseq
    %v1851 = vshrl.u32 %v1850, 7
    %v1852 = vsub.s32 1, %v1851
    %v1853 = vrot.slane %v1844, %v1852
    %v1920 = vunpack.c.l.b16 %v1780
    %v1921 = vunpack.c.h.b16 %v1780
    %v1922 = vunpack.c.l.b16 %v1781
    %v1923 = vunpack.c.h.b16 %v1781
    %v1924 = vunpack.c.l.b16 %v1782
    %v1925 = vunpack.c.h.b16 %v1782
    %v1926 = vunpack.c.l.b16 %v1783
    %v1927 = vunpack.c.h.b16 %v1783
    %v1928 = vunpack.c.l.b16 %v1784
    %v1929 = vunpack.c.h.b16 %v1784
    %v1930 = vunpack.c.l.b16 %v1785
    %v1931 = vunpack.c.h.b16 %v1785
    %v1932 = vunpack.c.l.b16 %v1786
    %v1933 = vunpack.c.h.b16 %v1786
    %v1934 = vunpack.c.l.b16 %v1787
    %v1935 = vunpack.c.h.b16 %v1787
    %v1936 = vunpack.c.l.b16 %v1788
    %v1937 = vunpack.c.h.b16 %v1788
    %v1938 = vunpack.c.l.b16 %v1789
    %v1939 = vunpack.c.h.b16 %v1789
    %v1940 = vunpack.c.l.b16 %v1790
    %v1941 = vunpack.c.h.b16 %v1790
    %v1942 = vunpack.c.l.b16 %v1791
    %v1943 = vunpack.c.h.b16 %v1791
    %v1944 = vunpack.c.l.b16 %v1792
    %v1945 = vunpack.c.h.b16 %v1792
    %v1946 = vunpack.c.l.b16 %v1793
    %v1947 = vunpack.c.h.b16 %v1793
    %v1948 = vunpack.c.l.b16 %v1794
    %v1949 = vunpack.c.h.b16 %v1794
    %v1950 = vunpack.c.l.b16 %v1795
    %v1951 = vunpack.c.h.b16 %v1795
    %v1952 = vunpack.c.l.b16 %v1796
    %v1953 = vunpack.c.h.b16 %v1796
    %v1954 = vunpack.c.l.b16 %v1797
    %v1955 = vunpack.c.h.b16 %v1797
    %v1956 = vunpack.c.l.b16 %v1798
    %v1957 = vunpack.c.h.b16 %v1798
    %v1958 = vunpack.c.l.b16 %v1799
    %v1959 = vunpack.c.h.b16 %v1799
    %v1960 = vunpack.c.l.b16 %v1800
    %v1961 = vunpack.c.h.b16 %v1800
    %v1962 = vunpack.c.l.b16 %v1801
    %v1963 = vunpack.c.h.b16 %v1801
    %v1964 = vunpack.c.l.b16 %v1802
    %v1965 = vunpack.c.h.b16 %v1802
    %v1966 = vunpack.c.l.b16 %v1803
    %v1967 = vunpack.c.h.b16 %v1803
    %v1968 = vunpack.c.l.b16 %v1804
    %v1969 = vunpack.c.h.b16 %v1804
    %v1970 = vunpack.c.l.b16 %v1805
    %v1971 = vunpack.c.h.b16 %v1805
    %v1972 = vunpack.c.l.b16 %v1806
    %v1973 = vunpack.c.h.b16 %v1806
    %v1974 = vunpack.c.l.b16 %v1807
    %v1975 = vunpack.c.h.b16 %v1807
    %v1976 = vunpack.c.l.b16 %v1808
    %v1977 = vunpack.c.h.b16 %v1808
    %v1978 = vunpack.c.l.b16 %v1809
    %v1979 = vunpack.c.h.b16 %v1809
    %v1980 = vunpack.c.l.b16 %v1810
    %v1981 = vunpack.c.h.b16 %v1810
    %v1982 = vunpack.c.l.b16 %v1811
    %v1983 = vunpack.c.h.b16 %v1811
    %v1984 = vunpack.c.l.b16 %v1812
    %v1985 = vunpack.c.h.b16 %v1812
    %v1986 = vunpack.c.l.b16 %v1813
    %v1987 = vunpack.c.h.b16 %v1813
    %v1988 = vunpack.c.l.b16 %v1814
    %v1989 = vunpack.c.h.b16 %v1814
    %v1990 = vunpack.c.l.b16 %v1815
    %v1991 = vunpack.c.h.b16 %v1815
    %v1992 = vunpack.c.l.b16 %v1816
    %v1993 = vunpack.c.h.b16 %v1816
    %v1994 = vunpack.c.l.b16 %v1817
    %v1995 = vunpack.c.h.b16 %v1817
    %v1996 = vunpack.c.l.b16 %v1818
    %v1997 = vunpack.c.h.b16 %v1818
    %v1998 = vunpack.c.l.b16 %v1819
    %v1999 = vunpack.c.h.b16 %v1819
    %v2000 = vunpack.c.l.b16 %v1820
    %v2001 = vunpack.c.h.b16 %v1820
    %v2002 = vunpack.c.l.b16 %v1821
    %v2003 = vunpack.c.h.b16 %v1821
    %v2004 = vunpack.c.l.b16 %v1822
    %v2005 = vunpack.c.h.b16 %v1822
    %v2006 = vunpack.c.l.b16 %v1823
    %v2007 = vunpack.c.h.b16 %v1823
    %v2008 = vunpack.c.l.b16 %v1824
    %v2009 = vunpack.c.h.b16 %v1824
    %v2010 = vunpack.c.l.b16 %v1825
    %v2011 = vunpack.c.h.b16 %v1825
    %v2012 = vunpack.c.l.b16 %v1826
    %v2013 = vunpack.c.h.b16 %v1826
    %v2014 = vunpack.c.l.b16 %v1827
    %v2015 = vunpack.c.h.b16 %v1827
    %v2016 = vunpack.c.l.b16 %v1828
    %v2017 = vunpack.c.h.b16 %v1828
    %v2018 = vunpack.c.l.b16 %v1829
    %v2019 = vunpack.c.h.b16 %v1829
    %v2020 = vunpack.c.l.b16 %v1830
    %v2021 = vunpack.c.h.b16 %v1830
    %v2022 = vunpack.c.l.b16 %v1831
    %v2023 = vunpack.c.h.b16 %v1831
    %v2024 = vunpack.c.l.b16 %v1832
    %v2025 = vunpack.c.h.b16 %v1832
    %v2026 = vunpack.c.l.b16 %v1833
    %v2027 = vunpack.c.h.b16 %v1833
    %v2028 = vunpack.c.l.b16 %v1834
    %v2029 = vunpack.c.h.b16 %v1834
    %v2030 = vunpack.c.l.b16 %v1835
    %v2031 = vunpack.c.h.b16 %v1835
    %v2032 = vunpack.c.l.b16 %v1836
    %v2033 = vunpack.c.h.b16 %v1836
    %v2034 = vunpack.c.l.b16 %v1837
    %v2035 = vunpack.c.h.b16 %v1837
    %v2036 = vunpack.c.l.b16 %v1838
    %v2037 = vunpack.c.h.b16 %v1838
    %v2038 = vunpack.c.l.b16 %v1839
    %v2039 = vunpack.c.h.b16 %v1839
    %v2040 = vunpack.c.l.b16 %v1840
    %v2041 = vunpack.c.h.b16 %v1840
    %v2042 = vunpack.c.l.b16 %v1841
    %v2043 = vunpack.c.h.b16 %v1841
    %v2044 = vunpack.c.l.b16 %v1842
    %v2045 = vunpack.c.h.b16 %v1842
    %v2046 = vunpack.c.l.b16 %v1843
    %v2047 = vunpack.c.h.b16 %v1843
    %v2048 = vpack.c.b16 %v1922, %v1920
    %v2049 = vpack.c.b16 %v1923, %v1921
    %v2050 = vpack.c.b16 %v1926, %v1924
    %v2051 = vpack.c.b16 %v1927, %v1925
    %v2052 = vpack.c.b16 %v1930, %v1928
    %v2053 = vpack.c.b16 %v1931, %v1929
    %v2054 = vpack.c.b16 %v1934, %v1932
    %v2055 = vpack.c.b16 %v1935, %v1933
    %v2056 = vpack.c.b16 %v1938, %v1936
    %v2057 = vpack.c.b16 %v1939, %v1937
    %v2058 = vpack.c.b16 %v1942, %v1940
    %v2059 = vpack.c.b16 %v1943, %v1941
    %v2060 = vpack.c.b16 %v1946, %v1944
    %v2061 = vpack.c.b16 %v1947, %v1945
    %v2062 = vpack.c.b16 %v1950, %v1948
    %v2063 = vpack.c.b16 %v1951, %v1949
    %v2064 = vpack.c.b16 %v1954, %v1952
    %v2065 = vpack.c.b16 %v1955, %v1953
    %v2066 = vpack.c.b16 %v1958, %v1956
    %v2067 = vpack.c.b16 %v1959, %v1957
    %v2068 = vpack.c.b16 %v1962, %v1960
    %v2069 = vpack.c.b16 %v1963, %v1961
    %v2070 = vpack.c.b16 %v1966, %v1964
    %v2071 = vpack.c.b16 %v1967, %v1965
    %v2072 = vpack.c.b16 %v1970, %v1968
    %v2073 = vpack.c.b16 %v1971, %v1969
    %v2074 = vpack.c.b16 %v1974, %v1972
    %v2075 = vpack.c.b16 %v1975, %v1973
    %v2076 = vpack.c.b16 %v1978, %v1976
    %v2077 = vpack.c.b16 %v1979, %v1977
    %v2078 = vpack.c.b16 %v1982, %v1980
    %v2079 = vpack.c.b16 %v1983, %v1981
    %v2080 = vpack.c.b16 %v1986, %v1984
    %v2081 = vpack.c.b16 %v1987, %v1985
    %v2082 = vpack.c.b16 %v1990, %v1988
    %v2083 = vpack.c.b16 %v1991, %v1989
    %v2084 = vpack.c.b16 %v1994, %v1992
    %v2085 = vpack.c.b16 %v1995, %v1993
    %v2086 = vpack.c.b16 %v1998, %v1996
    %v2087 = vpack.c.b16 %v1999, %v1997
    %v2088 = vpack.c.b16 %v2002, %v2000
    %v2089 = vpack.c.b16 %v2003, %v2001
    %v2090 = vpack.c.b16 %v2006, %v2004
    %v2091 = vpack.c.b16 %v2007, %v2005
    %v2092 = vpack.c.b16 %v2010, %v2008
    %v2093 = vpack.c.b16 %v2011, %v2009
    %v2094 = vpack.c.b16 %v2014, %v2012
    %v2095 = vpack.c.b16 %v2015, %v2013
    %v2096 = vpack.c.b16 %v2018, %v2016
    %v2097 = vpack.c.b16 %v2019, %v2017
    %v2098 = vpack.c.b16 %v2022, %v2020
    %v2099 = vpack.c.b16 %v2023, %v2021
    %v2100 = vpack.c.b16 %v2026, %v2024
    %v2101 = vpack.c.b16 %v2027, %v2025
    %v2102 = vpack.c.b16 %v2030, %v2028
    %v2103 = vpack.c.b16 %v2031, %v2029
    %v2104 = vpack.c.b16 %v2034, %v2032
    %v2105 = vpack.c.b16 %v2035, %v2033
    %v2106 = vpack.c.b16 %v2038, %v2036
    %v2107 = vpack.c.b16 %v2039, %v2037
    %v2108 = vpack.c.b16 %v2042, %v2040
    %v2109 = vpack.c.b16 %v2043, %v2041
    %v2110 = vpack.c.b16 %v2046, %v2044
    %v2111 = vpack.c.b16 %v2047, %v2045
    %2176 = vmatprep.subr.bf16.mxu0 %v2049
    %2177 = vmatpush1.bf16.msra.mxu0 %v2048
    %2178 = vmatprep.subr.bf16.mxu0 %v2051
    %2179 = vmatpush1.bf16.msra.mxu0 %v2050
    %2180 = vmatprep.subr.bf16.mxu0 %v2053
    %2181 = vmatpush1.bf16.msra.mxu0 %v2052
    %2182 = vmatprep.subr.bf16.mxu0 %v2055
    %2183 = vmatpush1.bf16.msra.mxu0 %v2054
    %2184 = vmatprep.subr.bf16.mxu0 %v2057
    %2185 = vmatpush1.bf16.msra.mxu0 %v2056
    %2186 = vmatprep.subr.bf16.mxu0 %v2059
    %2187 = vmatpush1.bf16.msra.mxu0 %v2058
    %2188 = vmatprep.subr.bf16.mxu0 %v2061
    %2189 = vmatpush1.bf16.msra.mxu0 %v2060
    %2190 = vmatprep.subr.bf16.mxu0 %v2063
    %2191 = vmatpush1.bf16.msra.mxu0 %v2062
    %2192 = vmatprep.subr.bf16.mxu0 %v2065
    %2193 = vmatpush1.bf16.msra.mxu0 %v2064
    %2194 = vmatprep.subr.bf16.mxu0 %v2067
    %2195 = vmatpush1.bf16.msra.mxu0 %v2066
    %2196 = vmatprep.subr.bf16.mxu0 %v2069
    %2197 = vmatpush1.bf16.msra.mxu0 %v2068
    %2198 = vmatprep.subr.bf16.mxu0 %v2071
    %2199 = vmatpush1.bf16.msra.mxu0 %v2070
    %2200 = vmatprep.subr.bf16.mxu0 %v2073
    %2201 = vmatpush1.bf16.msra.mxu0 %v2072
    %2202 = vmatprep.subr.bf16.mxu0 %v2075
    %2203 = vmatpush1.bf16.msra.mxu0 %v2074
    %2204 = vmatprep.subr.bf16.mxu0 %v2077
    %2205 = vmatpush1.bf16.msra.mxu0 %v2076
    %2206 = vmatprep.subr.bf16.mxu0 %v2079
    %2207 = vmatpush1.bf16.msra.mxu0 %v2078
    %2208 = vmatprep.mubr.bf16.mxu0 %v1777
    %2209 = vmatmul.mubr.bf16.gmra.mrb[0].mxu0 %v1776
    %v2210 = vpop.f32.mrb[0].mxu0
    %v2211 = vadd.f32 %v1849, %v2210
    %v2212 = vpop.f32.mrb[0].mxu0
    %v2213 = vadd.f32 %v1853, %v2212
    %v2214 = vpop.f32.mrb[0].mxu0
    %v2215 = vadd.f32 %v1849, %v2214
    %v2216 = vpop.f32.mrb[0].mxu0
    %v2217 = vadd.f32 %v1853, %v2216
    %2218 = vdwg.mxu0
    %2219 = vmatprep.subr.bf16.mxu0 %v2081
    %2220 = vmatpush1.bf16.msra.mxu0 %v2080
    %2221 = vmatprep.subr.bf16.mxu0 %v2083
    %2222 = vmatpush1.bf16.msra.mxu0 %v2082
    %2223 = vmatprep.subr.bf16.mxu0 %v2085
    %2224 = vmatpush1.bf16.msra.mxu0 %v2084
    %2225 = vmatprep.subr.bf16.mxu0 %v2087
    %2226 = vmatpush1.bf16.msra.mxu0 %v2086
    %2227 = vmatprep.subr.bf16.mxu0 %v2089
    %2228 = vmatpush1.bf16.msra.mxu0 %v2088
    %2229 = vmatprep.subr.bf16.mxu0 %v2091
    %2230 = vmatpush1.bf16.msra.mxu0 %v2090
    %2231 = vmatprep.subr.bf16.mxu0 %v2093
    %2232 = vmatpush1.bf16.msra.mxu0 %v2092
    %2233 = vmatprep.subr.bf16.mxu0 %v2095
    %2234 = vmatpush1.bf16.msra.mxu0 %v2094
    %2235 = vmatprep.subr.bf16.mxu0 %v2097
    %2236 = vmatpush1.bf16.msra.mxu0 %v2096
    %2237 = vmatprep.subr.bf16.mxu0 %v2099
    %2238 = vmatpush1.bf16.msra.mxu0 %v2098
    %2239 = vmatprep.subr.bf16.mxu0 %v2101
    %2240 = vmatpush1.bf16.msra.mxu0 %v2100
    %2241 = vmatprep.subr.bf16.mxu0 %v2103
    %2242 = vmatpush1.bf16.msra.mxu0 %v2102
    %2243 = vmatprep.subr.bf16.mxu0 %v2105
    %2244 = vmatpush1.bf16.msra.mxu0 %v2104
    %2245 = vmatprep.subr.bf16.mxu0 %v2107
    %2246 = vmatpush1.bf16.msra.mxu0 %v2106
    %2247 = vmatprep.subr.bf16.mxu0 %v2109
    %2248 = vmatpush1.bf16.msra.mxu0 %v2108
    %2249 = vmatprep.subr.bf16.mxu0 %v2111
    %2250 = vmatpush1.bf16.msra.mxu0 %v2110
    %2251 = vmatprep.mubr.bf16.mxu0 %v1779
    %2252 = vmatmul.mubr.bf16.gmra.mrb[0].mxu0 %v1778
    %v2253 = vpop.f32.mrb[0].mxu0
    %v2254 = vadd.f32 %v2211, %v2253
    %v2255 = vpop.f32.mrb[0].mxu0
    %v2256 = vadd.f32 %v2213, %v2255
    %v2257 = vpop.f32.mrb[0].mxu0
    %v2258 = vadd.f32 %v2215, %v2257
    %v2259 = vpop.f32.mrb[0].mxu0
    %v2260 = vadd.f32 %v2217, %v2259
    %2261 = vdwg.mxu0
    %v2262 = vmax.f32 %v2254, 0.0
    %v2263 = vmax.f32 %v2256, 0.0
    %v2264 = vmax.f32 %v2258, 0.0
    %v2265 = vmax.f32 %v2260, 0.0
    %v2266 = vpack.c.bf16 %v2264, %v2262
    %v2267 = vpack.c.bf16 %v2265, %v2263
    %v2268 = vld [vmem:[#allocation8] sm:$0xf]
    %v2269 = vld [vmem:[#allocation8 + $0x4] sm:$0xf]
    %v2270 = vld [vmem:[#allocation8 + $0x8] sm:$0xf]
    %v2271 = vld [vmem:[#allocation8 + $0xc] sm:$0xf]
    %v2272 = vld [vmem:[#allocation8 + $0x10] sm:$0xf]
    %v2273 = vld [vmem:[#allocation8 + $0x14] sm:$0xf]
    %v2274 = vld [vmem:[#allocation8 + $0x18] sm:$0xf]
    %v2275 = vld [vmem:[#allocation8 + $0x1c] sm:$0xf]
    %v2276 = vld [vmem:[#allocation8 + $0x20] sm:$0xf]
    %v2277 = vld [vmem:[#allocation8 + $0x24] sm:$0xf]
    %v2278 = vld [vmem:[#allocation8 + $0x28] sm:$0xf]
    %v2279 = vld [vmem:[#allocation8 + $0x2c] sm:$0xf]
    %v2280 = vld [vmem:[#allocation8 + $0x30] sm:$0xf]
    %v2281 = vld [vmem:[#allocation8 + $0x34] sm:$0xf]
    %v2282 = vld [vmem:[#allocation8 + $0x38] sm:$0xf]
    %v2283 = vld [vmem:[#allocation8 + $0x3c] sm:$0xf]
    %v2284 = vld [vmem:[#allocation8 + $0x40] sm:$0xf]
    %v2285 = vld [vmem:[#allocation8 + $0x44] sm:$0xf]
    %v2286 = vld [vmem:[#allocation8 + $0x48] sm:$0xf]
    %v2287 = vld [vmem:[#allocation8 + $0x4c] sm:$0xf]
    %v2288 = vld [vmem:[#allocation8 + $0x50] sm:$0xf]
    %v2289 = vld [vmem:[#allocation8 + $0x54] sm:$0xf]
    %v2290 = vld [vmem:[#allocation8 + $0x58] sm:$0xf]
    %v2291 = vld [vmem:[#allocation8 + $0x5c] sm:$0xf]
    %v2292 = vld [vmem:[#allocation8 + $0x60] sm:$0xf]
    %v2293 = vld [vmem:[#allocation8 + $0x64] sm:$0xf]
    %v2294 = vld [vmem:[#allocation8 + $0x68] sm:$0xf]
    %v2295 = vld [vmem:[#allocation8 + $0x6c] sm:$0xf]
    %v2296 = vld [vmem:[#allocation8 + $0x70] sm:$0xf]
    %v2297 = vld [vmem:[#allocation8 + $0x74] sm:$0xf]
    %v2298 = vld [vmem:[#allocation8 + $0x78] sm:$0xf]
    %v2299 = vld [vmem:[#allocation8 + $0x7c] sm:$0xf]
    %v2300 = vld [vmem:[%s6] sm:$0x1]
    %v2302 = vlaneseq
    %v2303 = vshrl.u32 %v2302, 7
    %v2304 = vsub.s32 0, %v2303
    %v2305 = vrot.slane %v2300, %v2304
    %v2339 = vunpack.c.l.b16 %v2268
    %v2340 = vunpack.c.l.b16 %v2269
    %v2341 = vunpack.c.l.b16 %v2270
    %v2342 = vunpack.c.l.b16 %v2271
    %v2343 = vunpack.c.l.b16 %v2272
    %v2344 = vunpack.c.l.b16 %v2273
    %v2345 = vunpack.c.l.b16 %v2274
    %v2346 = vunpack.c.l.b16 %v2275
    %v2347 = vunpack.c.l.b16 %v2276
    %v2348 = vunpack.c.l.b16 %v2277
    %v2349 = vunpack.c.l.b16 %v2278
    %v2350 = vunpack.c.l.b16 %v2279
    %v2351 = vunpack.c.l.b16 %v2280
    %v2352 = vunpack.c.l.b16 %v2281
    %v2353 = vunpack.c.l.b16 %v2282
    %v2354 = vunpack.c.l.b16 %v2283
    %v2355 = vunpack.c.l.b16 %v2284
    %v2356 = vunpack.c.l.b16 %v2285
    %v2357 = vunpack.c.l.b16 %v2286
    %v2358 = vunpack.c.l.b16 %v2287
    %v2359 = vunpack.c.l.b16 %v2288
    %v2360 = vunpack.c.l.b16 %v2289
    %v2361 = vunpack.c.l.b16 %v2290
    %v2362 = vunpack.c.l.b16 %v2291
    %v2363 = vunpack.c.l.b16 %v2292
    %v2364 = vunpack.c.l.b16 %v2293
    %v2365 = vunpack.c.l.b16 %v2294
    %v2366 = vunpack.c.l.b16 %v2295
    %v2367 = vunpack.c.l.b16 %v2296
    %v2368 = vunpack.c.l.b16 %v2297
    %v2369 = vunpack.c.l.b16 %v2298
    %v2370 = vunpack.c.l.b16 %v2299
    %v2371 = vpack.c.b16 %v2340, %v2339
    %v2372 = vpack.c.b16 %v2342, %v2341
    %v2373 = vpack.c.b16 %v2344, %v2343
    %v2374 = vpack.c.b16 %v2346, %v2345
    %v2375 = vpack.c.b16 %v2348, %v2347
    %v2376 = vpack.c.b16 %v2350, %v2349
    %v2377 = vpack.c.b16 %v2352, %v2351
    %v2378 = vpack.c.b16 %v2354, %v2353
    %v2379 = vpack.c.b16 %v2356, %v2355
    %v2380 = vpack.c.b16 %v2358, %v2357
    %v2381 = vpack.c.b16 %v2360, %v2359
    %v2382 = vpack.c.b16 %v2362, %v2361
    %v2383 = vpack.c.b16 %v2364, %v2363
    %v2384 = vpack.c.b16 %v2366, %v2365
    %v2385 = vpack.c.b16 %v2368, %v2367
    %v2386 = vpack.c.b16 %v2370, %v2369
    %2403 = vmatprep.subr.bf16.mxu0 0
    %2404 = vmatpush1.bf16.msra.mxu0 %v2371
    %2405 = vmatprep.subr.bf16.mxu0 0
    %2406 = vmatpush1.bf16.msra.mxu0 %v2372
    %2407 = vmatprep.subr.bf16.mxu0 0
    %2408 = vmatpush1.bf16.msra.mxu0 %v2373
    %2409 = vmatprep.subr.bf16.mxu0 0
    %2410 = vmatpush1.bf16.msra.mxu0 %v2374
    %2411 = vmatprep.subr.bf16.mxu0 0
    %2412 = vmatpush1.bf16.msra.mxu0 %v2375
    %2413 = vmatprep.subr.bf16.mxu0 0
    %2414 = vmatpush1.bf16.msra.mxu0 %v2376
    %2415 = vmatprep.subr.bf16.mxu0 0
    %2416 = vmatpush1.bf16.msra.mxu0 %v2377
    %2417 = vmatprep.subr.bf16.mxu0 0
    %2418 = vmatpush1.bf16.msra.mxu0 %v2378
    %2419 = vmatprep.subr.bf16.mxu0 0
    %2420 = vmatpush1.bf16.msra.mxu0 %v2379
    %2421 = vmatprep.subr.bf16.mxu0 0
    %2422 = vmatpush1.bf16.msra.mxu0 %v2380
    %2423 = vmatprep.subr.bf16.mxu0 0
    %2424 = vmatpush1.bf16.msra.mxu0 %v2381
    %2425 = vmatprep.subr.bf16.mxu0 0
    %2426 = vmatpush1.bf16.msra.mxu0 %v2382
    %2427 = vmatprep.subr.bf16.mxu0 0
    %2428 = vmatpush1.bf16.msra.mxu0 %v2383
    %2429 = vmatprep.subr.bf16.mxu0 0
    %2430 = vmatpush1.bf16.msra.mxu0 %v2384
    %2431 = vmatprep.subr.bf16.mxu0 0
    %2432 = vmatpush1.bf16.msra.mxu0 %v2385
    %2433 = vmatprep.subr.bf16.mxu0 0
    %2434 = vmatpush1.bf16.msra.mxu0 %v2386
    %2435 = vmatprep.mubr.bf16.mxu0 %v2267
    %2436 = vmatmul.mubr.bf16.gmra.mrb[0].mxu0 %v2266
    %v2437 = vpop.f32.mrb[0].mxu0
    %v2438 = vadd.f32 %v2305, %v2437
    %v2439 = vpop.f32.mrb[0].mxu0
    %v2440 = vpop.f32.mrb[0].mxu0
    %v2441 = vadd.f32 %v2305, %v2440
    %v2442 = vpop.f32.mrb[0].mxu0
    %2443 = vdwg.mxu0
    %2444 = vadd.xlane.f32.xlu0 %v2438
    %v2445 = vpop.xlane.xlu0 %2444
    %2446 = vadd.xlane.f32.xlu0 %v2441
    %v2447 = vpop.xlane.xlu0 %2446
    %v2448 = vrcp.pop 128.0
    %v2449 = vmul.f32 %v2445, %v2448
    %v2450 = vmul.f32 %v2447, %v2448
    %v2451 = vmul.f32 %v2438, %v2438
    %v2452 = vmul.f32 %v2441, %v2441
    %2453 = vadd.xlane.f32.xlu0 %v2451
    %v2454 = vpop.xlane.xlu0 %2453
    %2455 = vadd.xlane.f32.xlu0 %v2452
    %v2456 = vpop.xlane.xlu0 %2455
    %v2457 = vmul.f32 %v2454, %v2448
    %v2458 = vmul.f32 %v2456, %v2448
    %v2459 = vmul.f32 %v2449, %v2449
    %v2460 = vmul.f32 %v2450, %v2450
    %v2461 = vsub.f32 %v2457, %v2459
    %v2462 = vsub.f32 %v2458, %v2460
    %v2463 = vmax.f32 %v2461, 0.0
    %v2464 = vmax.f32 %v2462, 0.0
    %v2465 = vsub.f32 %v2438, %v2449
    %v2466 = vsub.f32 %v2441, %v2450
    %v2467 = vadd.f32 %v2463, 1e-05
    %v2468 = vadd.f32 %v2464, 1e-05
    %v2469 = vrsqrt.pop %v2467
    %v2470 = vrsqrt.pop %v2468
    %v2471 = vmul.f32 %v2465, %v2469
    %v2472 = vmul.f32 %v2466, %v2470
    %v2473 = vld [vmem:[%s7] sm:$0x1]
    %v2475 = vlaneseq
    %v2476 = vshrl.u32 %v2475, 7
    %v2477 = vsub.s32 0, %v2476
    %v2478 = vrot.slane %v2473, %v2477
    %v2480 = vmul.f32 %v2471, %v2478
    %v2481 = vmul.f32 %v2472, %v2478
    %v2482 = vld [vmem:[%s8] sm:$0x1]
    %v2484 = vlaneseq
    %v2485 = vshrl.u32 %v2484, 7
    %v2486 = vsub.s32 0, %v2485
    %v2487 = vrot.slane %v2482, %v2486
    %v2489 = vadd.f32 %v2480, %v2487
    %v2490 = vadd.f32 %v2481, %v2487
    %2491 = vst [vmem:[#allocation10] sm:$0xff] %v2489
    %2492 = vst [vmem:[#allocation10 + $0x8] sm:$0xff] %v2490
    // Predicated region
    $region54: #{tpu_custom_call.1} parent=1 // pred_check
      _
    $region55: #{tpu_custom_call.1} parent=1 // pred_check_branch
      %2494 = sbr.rel (0) target = $region57
    $region56: #{tpu_custom_call.1} parent=1 // pred_region
      %s2496 = ssub.s32 256, 256
      %2497 = vsyncadd [#allocation4], %s2496
      %s2498 = sshll.u32 [#allocation10], 4
      %s2499 = int_to_ptr.vmem [resolvable:$true] %s2498
      %2504 = dma.vmem_to_hbm [thread:$0]  %s2499, 256, %s9, [#allocation4], 128, 128, 8
    $region57: #{tpu_custom_call.1} parent=1 // pred_fallthru
      _
    // Predicated region
    $region58: #{tpu_custom_call.1} parent=1 // pred_check
      _
    $region59: #{tpu_custom_call.1} parent=1 // pred_check_branch
      %2506 = sbr.rel (0) target = $region61
    $region60: #{tpu_custom_call.1} parent=1 // pred_region
      %2507 = dma.done [#allocation4], 256
    $region61: #{tpu_custom_call.1} parent=1 // pred_fallthru
      _
    %2508 = vsyncpa [#allocation3], 1
    %2509 = vsyncpa [#allocation6], 1
    %2510 = vsyncpa [#allocation9], 1
    %2511 = vsyncpa [#allocation4], 1

</llo_original>
